<compile_context>
chip_gen: v5e
topology: v5e:2x2
jax: 0.10.0
libtpu: 0.0.40
codegen_flags: <defaults>
</compile_context>

<pallas_src>
import functools

import jax
import jax.numpy as jnp
from jax.experimental import pallas as pl
from jax.experimental.pallas import tpu as pltpu


def _round_up(x: int, m: int) -> int:
    return ((x + m - 1) // m) * m


def _head_kernel(x_ref, w_ref, b_ref, o_ref, *, use_sigmoid: bool):
    # x_ref: [B, H]   w_ref: [H, TN]   b_ref: [1, TN]   o_ref: [B, TN]
    y = jnp.dot(x_ref[...].astype(w_ref.dtype), w_ref[...],
                preferred_element_type=jnp.float32)
    y = y + b_ref[...]                        # broadcast [1, TN] -> [B, TN]
    if use_sigmoid:
        y = jax.nn.sigmoid(y)
    o_ref[...] = y.astype(o_ref.dtype)


def prepare_head_params(w, b, *, tile_n: int = 768,
                        weight_dtype=jnp.float32):
    """One-time (init-path) prep: pad N up to a multiple of the tile size.

    w: [H, N] float32 (torch weight.T), b: [N] float32.
    Returns (w_pad [H, n_pad], b_pad [1, n_pad], tn).
    """
    H, N = w.shape
    assert b.shape == (N,)
    assert tile_n % 128 == 0, "tile_n must be a multiple of 128 (lane width)"

    # Tile size along N, capped at the 128-rounded N; n_pad is a multiple of
    # tn by construction, so the grid always divides evenly.
    tn = min(tile_n, _round_up(N, 128))
    n_pad = _round_up(N, tn)
    if n_pad != N:
        w = jnp.pad(w, ((0, 0), (0, n_pad - N)))
        b = jnp.pad(b, (0, n_pad - N))
    w_pad = w.astype(weight_dtype)
    b_pad = b.reshape(1, n_pad).astype(jnp.float32)
    return w_pad, b_pad, tn


def cls_mlp_head(last_hidden_state, w_pad, b_pad, tn, n_out, *,
                 activation: bool = False):
    """CLS extraction + Linear(+Sigmoid) head via a tiled Pallas kernel.

    last_hidden_state: [B, S, H] float32   (encoder output)
    w_pad:             [H, n_pad]          (pre-padded at init)
    b_pad:             [1, n_pad] float32
    returns:           [B, n_out] float32
    """
    B, S, H = last_hidden_state.shape
    Hw, n_pad = w_pad.shape
    assert Hw == H and b_pad.shape == (1, n_pad)
    assert n_pad % tn == 0, (n_pad, tn)
    grid_n = n_pad // tn

    # Cheap XLA slice of the CLS row: kernel only streams [B, H] activations.
    cls = last_hidden_state[:, 0, :]                      # [B, H]

    kernel = functools.partial(_head_kernel, use_sigmoid=activation)

    out = pl.pallas_call(
        kernel,
        out_shape=jax.ShapeDtypeStruct((B, n_pad), jnp.float32),
        grid_spec=pltpu.PrefetchScalarGridSpec(
            num_scalar_prefetch=0,
            grid=(grid_n,),
            in_specs=[
                # CLS activations stay resident across the N-tile axis.
                pl.BlockSpec((B, H), lambda i: (0, 0)),
                # Weight / bias / output tiled along N (double-buffered DMA).
                pl.BlockSpec((H, tn), lambda i: (0, i)),
                pl.BlockSpec((1, tn), lambda i: (0, i)),
            ],
            out_specs=pl.BlockSpec((B, tn), lambda i: (0, i)),
        ),
        compiler_params=pltpu.CompilerParams(
            # Independent N tiles -> sharded across both TCs on v7x.
            dimension_semantics=("parallel",),
            # 768x768 f32 weight tile double-buffered is ~4.5 MiB; leave room.
            vmem_limit_bytes=32 * 1024 * 1024,
        ),
    )(cls, w_pad, b_pad)

    # Slice off the N padding (no-op when n_pad == n_out).
    return out[:, :n_out]


def reference(last_hidden_state, w, b, *, activation: bool = False):
    y = last_hidden_state[:, 0] @ w + b
    if activation:
        y = jax.nn.sigmoid(y)
    return y


if __name__ == "__main__":
    # Small shapes consistent with the module: hidden = 768 (BERT), head n = 1400.
    B, S, H, N = 2, 8, 768, 1400
    activation = False  # matches Model(..., activation=False) default

    key = jax.random.PRNGKey(0)
    kx, kw, kb = jax.random.split(key, 3)

    # Synthetic "encoder last_hidden_state" (the BERT encoder itself is not
    # translated — see TODO(synk) above).
    x = jax.random.normal(kx, (B, S, H), dtype=jnp.float32)

    # Deterministic nn.Linear(768, N)-style init (uniform bound = 1/sqrt(fan_in)).
    bound = 1.0 / (H ** 0.5)
    w = jax.random.uniform(kw, (H, N), minval=-bound, maxval=bound,
                           dtype=jnp.float32)
    b = jax.random.uniform(kb, (N,), minval=-bound, maxval=bound,
                           dtype=jnp.float32)

    # --- init-time prep (done once, not per forward call) ------------------
    w_pad, b_pad, tn = prepare_head_params(w, b, tile_n=768,
                                           weight_dtype=jnp.float32)

    # --- forward ------------------------------------------------------------
    head = jax.jit(functools.partial(cls_mlp_head, tn=tn, n_out=N,
                                     activation=activation))
    out = head(x, w_pad, b_pad)
    out = jax.block_until_ready(out)

    ref = reference(x, w, b, activation=activation)
    assert out.shape == (B, N), out.shape
    assert jnp.allclose(out, ref, atol=2e-3, rtol=2e-3), "mismatch vs reference"

    print("KERNEL_OK")
</pallas_src>

<mosaic_0001>
module attributes {stable_mosaic.version = 11 : i64} {
  func.func @_head_kernel(%arg0: i32, %arg1: memref<2x768xf32, #tpu.memory_space<vmem>>, %arg2: memref<768x768xf32, #tpu.memory_space<vmem>>, %arg3: memref<1x768xf32, #tpu.memory_space<vmem>>, %arg4: memref<2x768xf32, #tpu.memory_space<vmem>>) attributes {dimension_semantics = [#tpu.dimension_semantics<parallel>], iteration_bounds = array<i64: 2>, scalar_prefetch = 0 : i64, scratch_operands = 0 : i64, tpu.core_type = #tpu.core_type<tc>, window_params = [{pipeline_mode = #tpu.pipeline_mode<synchronous>, transform_indices = @transform_0, window_bounds = array<i64: 2, 768>}, {transform_indices = @transform_1, window_bounds = array<i64: 768, 768>}, {transform_indices = @transform_2, window_bounds = array<i64: 1, 768>}, {transform_indices = @transform_3, window_bounds = array<i64: 2, 768>}]} {
    %c0 = arith.constant 0 : index
    %c0_0 = arith.constant 0 : index
    %0 = vector.load %arg1[%c0, %c0_0] : memref<2x768xf32, #tpu.memory_space<vmem>>, vector<2x768xf32>
    %c0_1 = arith.constant 0 : index
    %c0_2 = arith.constant 0 : index
    %1 = vector.load %arg2[%c0_1, %c0_2] : memref<768x768xf32, #tpu.memory_space<vmem>>, vector<768x768xf32>
    %cst = arith.constant dense<0.000000e+00> : vector<2x768xf32>
    %2 = tpu.matmul %0, %1, %cst {dimension_numbers = #tpu.dot_dimension_numbers<[1], [0], [0], [1], [0, 0, 1, 1], [], []>} : vector<2x768xf32>, vector<768x768xf32>, vector<2x768xf32> -> vector<2x768xf32>
    %c0_3 = arith.constant 0 : index
    %c0_4 = arith.constant 0 : index
    %3 = vector.load %arg3[%c0_3, %c0_4] : memref<1x768xf32, #tpu.memory_space<vmem>>, vector<1x768xf32>
    %4 = vector.broadcast %3 : vector<1x768xf32> to vector<2x768xf32>
    %5 = arith.addf %2, %4 : vector<2x768xf32>
    %c0_5 = arith.constant 0 : index
    %c0_6 = arith.constant 0 : index
    %6 = vector.load %arg4[%c0_5, %c0_6] : memref<2x768xf32, #tpu.memory_space<vmem>>, vector<2x768xf32>
    tpu.vector_store %arg4[%c0_5, %c0_6], %5 {strides = array<i32>} : memref<2x768xf32, #tpu.memory_space<vmem>>, vector<2x768xf32>,
    return
  }
  func.func @transform_0(%arg0: i32) -> (i32, i32) {
    %c0_i32 = arith.constant 0 : i32
    %c0_i32_0 = arith.constant 0 : i32
    %c0_i32_1 = arith.constant 0 : i32
    return %c0_i32, %c0_i32_0 : i32, i32
  }
  func.func @transform_1(%arg0: i32) -> (i32, i32) {
    %c0_i32 = arith.constant 0 : i32
    %c0_i32_0 = arith.constant 0 : i32
    return %c0_i32, %arg0 : i32, i32
  }
  func.func @transform_2(%arg0: i32) -> (i32, i32) {
    %c0_i32 = arith.constant 0 : i32
    %c0_i32_0 = arith.constant 0 : i32
    return %c0_i32, %arg0 : i32, i32
  }
  func.func @transform_3(%arg0: i32) -> (i32, i32) {
    %c0_i32 = arith.constant 0 : i32
    %c0_i32_0 = arith.constant 0 : i32
    return %c0_i32, %arg0 : i32, i32
  }
}

</mosaic_0001>

<llo_original>
// kernel: cls_mlp_head.1
$region0: #{cls_mlp_head.1}
  #allocation0 [shape = 'u32[]', space=smem, size = 0x4, offset = 0x4, fixed_abs, tag = 'smem constant byte address 0x4 - core index']
  #allocation1 [shape = 'u32[72,128]{1,0:T(1,128)}', space=vmem, size = 0x9000, scoped, tag = 'internal scratch']
  %s0 = inlined_call_operand.vmem [shape: f32[2,768], index: 0, kind: input, shape index: {}]
  %s1 = inlined_call_operand.hbm [shape: f32[768,1536], index: 1, kind: input, shape index: {}]
  %s2 = inlined_call_operand.hbm [shape: f32[1,1536], index: 2, kind: input, shape index: {}]
  %s3 = inlined_call_operand.vmem [shape: f32[2,1536], index: 3, kind: output, shape index: {}]
  %s4 = sld [smem:[#allocation0]]
  $region53: #{cls_mlp_head.1} parent=0
    _
  %s6 = ssub.s32 1, %s4
  %s7 = scalar_select 0, %s6, %s4
  $region1: #{cls_mlp_head.1} parent=0
    #allocation2 [shape = 'u8[4718592]{0}', space=vmem, size = 0x480000, scoped, tag = 'input window, operand 1']
    #allocation3 [shape = 's32[2]{0}', space=sflag, size = 0x8, scoped, tag = 'scoped memory for cls_mlp_head.1']
    #allocation4 [shape = 'u8[6144]{0}', space=vmem, size = 0x1800, scoped, tag = 'input window, operand 2']
    #allocation5 [shape = 's32[2]{0}', space=sflag, size = 0x8, scoped, tag = 'scoped memory for cls_mlp_head.1']
    %8 = vsyncpa [#allocation3], 0
    %s9 = scalar_lea.sflag [#allocation3], 1
    %10 = vsyncpa %s9, 0
    %11 = vsyncpa [#allocation5], 0
    %s12 = scalar_lea.sflag [#allocation5], 1
    %13 = vsyncpa %s12, 0
    loop: start=0, step=1, limit=4
    $region2: #{cls_mlp_head.1} parent=1 // loop_pre_header
      _
    $region3: #{cls_mlp_head.1} parent=1 // loop_header
      %s15 = sphi 0, %s19
      %p16 = scmp.ge.s32.totalorder %s15, 4
      %s23 = sphi 0, %s23
      %s25 = sphi 0, %s23
      %s26 = sphi 0, %s25
      %s40 = sphi 0, %s26
      %s46 = sphi 0, %s48
      %s49 = sphi 0, %s46
      %s50 = sphi 0, %s49
      %s66 = sphi 0, %s50
      %s72 = sphi 0, %s74
      %s75 = sphi 0, %s72
      %s76 = sphi 0, %s75
      %s92 = sphi 0, %s76
      %s98 = sphi 0, %s100
      %s101 = sphi 0, %s98
      %s102 = sphi 0, %s101
      %s118 = sphi 0, %s102
    $region4: #{cls_mlp_head.1} parent=1 // loop_header_branch
      %18 = sbr.rel (%p16) target = $region8
    $region5: #{cls_mlp_head.1} parent=1 // loop_body
      %s20 = ssub.s32 %s15, 1
      %s21 = ssub.s32 %s15, 2
      %s22 = sadd.s32 %s15, 1
      %s24 = sadd.s32 %s23, 1
      %p27 = scmp.eq.s32.totalorder %s15, 1
      %p28 = scmp.ne.s32.totalorder %s23, %s25
      %p29 = scmp.eq.s32.totalorder %s15, 0
      %p30 = por %p28, %p29
      %p31 = scmp.ne.s32.totalorder %s23, %s25
      %p32 = scmp.eq.s32.totalorder %s20, 1
      %p33 = por %p31, %p32
      %p34 = scmp.ne.s32.totalorder %s25, %s26
      %p35 = scmp.eq.s32.totalorder %s20, 0
      %p36 = por %p34, %p35
      %p37 = scmp.ne.s32.totalorder %s25, %s26
      %p38 = scmp.eq.s32.totalorder %s21, 1
      %p39 = por %p37, %p38
      %p41 = scmp.ne.s32.totalorder %s26, %s40
      %p42 = scmp.eq.s32.totalorder %s21, 0
      %p43 = por %p41, %p42
      %s44 = ssub.s32 %s15, %s22
      %p45 = scmp.eq.s32.totalorder %s44, 0
      %s47 = sadd.s32 %s46, 1
      %s48 = scalar_select %p45, %s46, %s47
      %p51 = pneg %p45
      %p52 = scmp.eq.s32.totalorder %s15, 1
      %p53 = por %p51, %p52
      %p54 = scmp.ne.s32.totalorder %s46, %s49
      %p55 = scmp.eq.s32.totalorder %s15, 0
      %p56 = por %p54, %p55
      %p57 = scmp.ne.s32.totalorder %s46, %s49
      %p58 = scmp.eq.s32.totalorder %s20, 1
      %p59 = por %p57, %p58
      %p60 = scmp.ne.s32.totalorder %s49, %s50
      %p61 = scmp.eq.s32.totalorder %s20, 0
      %p62 = por %p60, %p61
      %p63 = scmp.ne.s32.totalorder %s49, %s50
      %p64 = scmp.eq.s32.totalorder %s21, 1
      %p65 = por %p63, %p64
      %p67 = scmp.ne.s32.totalorder %s50, %s66
      %p68 = scmp.eq.s32.totalorder %s21, 0
      %p69 = por %p67, %p68
      %s70 = ssub.s32 %s15, %s22
      %p71 = scmp.eq.s32.totalorder %s70, 0
      %s73 = sadd.s32 %s72, 1
      %s74 = scalar_select %p71, %s72, %s73
      %p77 = pneg %p71
      %p78 = scmp.eq.s32.totalorder %s15, 1
      %p79 = por %p77, %p78
      %p80 = scmp.ne.s32.totalorder %s72, %s75
      %p81 = scmp.eq.s32.totalorder %s15, 0
      %p82 = por %p80, %p81
      %p83 = scmp.ne.s32.totalorder %s72, %s75
      %p84 = scmp.eq.s32.totalorder %s20, 1
      %p85 = por %p83, %p84
      %p86 = scmp.ne.s32.totalorder %s75, %s76
      %p87 = scmp.eq.s32.totalorder %s20, 0
      %p88 = por %p86, %p87
      %p89 = scmp.ne.s32.totalorder %s75, %s76
      %p90 = scmp.eq.s32.totalorder %s21, 1
      %p91 = por %p89, %p90
      %p93 = scmp.ne.s32.totalorder %s76, %s92
      %p94 = scmp.eq.s32.totalorder %s21, 0
      %p95 = por %p93, %p94
      %s96 = ssub.s32 %s15, %s22
      %p97 = scmp.eq.s32.totalorder %s96, 0
      %s99 = sadd.s32 %s98, 1
      %s100 = scalar_select %p97, %s98, %s99
      %p103 = pneg %p97
      %p104 = scmp.eq.s32.totalorder %s15, 1
      %p105 = por %p103, %p104
      %p106 = scmp.ne.s32.totalorder %s98, %s101
      %p107 = scmp.eq.s32.totalorder %s15, 0
      %p108 = por %p106, %p107
      %p109 = scmp.ne.s32.totalorder %s98, %s101
      %p110 = scmp.eq.s32.totalorder %s20, 1
      %p111 = por %p109, %p110
      %p112 = scmp.ne.s32.totalorder %s101, %s102
      %p113 = scmp.eq.s32.totalorder %s20, 0
      %p114 = por %p112, %p113
      %p115 = scmp.ne.s32.totalorder %s101, %s102
      %p116 = scmp.eq.s32.totalorder %s21, 1
      %p117 = por %p115, %p116
      %p119 = scmp.ne.s32.totalorder %s102, %s118
      %p120 = scmp.eq.s32.totalorder %s21, 0
      %p121 = por %p119, %p120
      %p122 = scmp.le.s32.totalorder 1, %s15
      %p123 = scmp.lt.s32.totalorder %s15, 3
      %p124 = pnand %p122, %p123
      %p125 = pneg %p124
      // Predicated region
      $region9: #{cls_mlp_head.1} parent=5 // pred_check
        _
      $region10: #{cls_mlp_head.1} parent=5 // pred_check_branch
        %127 = sbr.rel (%p124) target = $region12
      $region11: #{cls_mlp_head.1} parent=5 // pred_region
        %s128 = ssub.s32 %s15, 1
        // Predicated region
        $region13: #{cls_mlp_head.1} parent=11 // pred_check
          %p129 = pneg %p36
        $region14: #{cls_mlp_head.1} parent=11 // pred_check_branch
          %131 = sbr.rel (%p129) target = $region16
        $region15: #{cls_mlp_head.1} parent=11 // pred_region
          _
        $region16: #{cls_mlp_head.1} parent=11 // pred_fallthru
          _
      $region12: #{cls_mlp_head.1} parent=5 // pred_fallthru
        _
      %p132 = scmp.lt.s32.totalorder %s15, 2
      // Predicated region
      $region17: #{cls_mlp_head.1} parent=5 // pred_check
        %p133 = pneg %p132
      $region18: #{cls_mlp_head.1} parent=5 // pred_check_branch
        %135 = sbr.rel (%p133) target = $region20
      $region19: #{cls_mlp_head.1} parent=5 // pred_region
        // Predicated region
        $region21: #{cls_mlp_head.1} parent=19 // pred_check
          %p136 = pneg %p56
        $region22: #{cls_mlp_head.1} parent=19 // pred_check_branch
          %138 = sbr.rel (%p136) target = $region24
        $region23: #{cls_mlp_head.1} parent=19 // pred_region
          %s139 = sand.u32 %s46, 1
          %s140 = scalar_lea.sflag [#allocation3], %s139
          %s141 = sand.u32 %s46, 1
          %s142 = smul.addr %s141, 4608
          %s143 = scalar_lea.vmem [#allocation2], %s142
          %s144 = smul.u32 6, %s15
          %146 = vsyncadd %s140, 0
          %s147 = smul.addr %s144, 8
          %s148 = scalar_lea.hbm %s1, %s147
          %s149 = sshll.u32 %s148, 4
          %s150 = int_to_ptr.hbm [resolvable:$true] %s149
          %s151 = sshll.u32 %s143, 4
          %s152 = int_to_ptr.vmem [resolvable:$true] %s151
          %157 = dma.hbm_to_vmem [thread:$0]  %s150, 73728, %s152, %s140, 1536, 768, 48
        $region24: #{cls_mlp_head.1} parent=19 // pred_fallthru
          _
        // Predicated region
        $region25: #{cls_mlp_head.1} parent=19 // pred_check
          %p158 = pneg %p82
        $region26: #{cls_mlp_head.1} parent=19 // pred_check_branch
          %160 = sbr.rel (%p158) target = $region28
        $region27: #{cls_mlp_head.1} parent=19 // pred_region
          %s161 = sand.u32 %s72, 1
          %s162 = scalar_lea.sflag [#allocation5], %s161
          %s163 = sand.u32 %s72, 1
          %s164 = smul.addr %s163, 6
          %s165 = scalar_lea.vmem [#allocation4], %s164
          %s166 = smul.u32 6, %s15
          %168 = vsyncadd %s162, 0
          %s169 = scalar_lea.hbm %s2, %s166
          %s171 = sshll.u32 %s169, 4
          %s172 = int_to_ptr.hbm [resolvable:$true] %s171
          %s173 = sshll.u32 %s165, 4
          %s174 = int_to_ptr.vmem [resolvable:$true] %s173
          %176 = dma.hbm_to_vmem [thread:$0]  %s172, 96, %s174, %s162
        $region28: #{cls_mlp_head.1} parent=19 // pred_fallthru
          _
      $region20: #{cls_mlp_head.1} parent=5 // pred_fallthru
        _
      %p177 = scmp.le.s32.totalorder 1, %s15
      %p178 = scmp.lt.s32.totalorder %s15, 3
      %p179 = pnand %p177, %p178
      %p180 = pneg %p179
      // Predicated region
      $region29: #{cls_mlp_head.1} parent=5 // pred_check
        _
      $region30: #{cls_mlp_head.1} parent=5 // pred_check_branch
        %182 = sbr.rel (%p179) target = $region32
      $region31: #{cls_mlp_head.1} parent=5 // pred_region
        %s183 = ssub.s32 %s15, 1
        %s184 = sand.u32 %s49, 1
        %s185 = scalar_lea.sflag [#allocation3], %s184
        %s186 = sand.u32 %s49, 1
        %s187 = smul.addr %s186, 4608
        %s188 = scalar_lea.vmem [#allocation2], %s187
        // Predicated region
        $region33: #{cls_mlp_head.1} parent=31 // pred_check
          %p189 = pneg %p62
        $region34: #{cls_mlp_head.1} parent=31 // pred_check_branch
          %191 = sbr.rel (%p189) target = $region36
        $region35: #{cls_mlp_head.1} parent=31 // pred_region
          %193 = dma.done %s185, 73728
        $region36: #{cls_mlp_head.1} parent=31 // pred_fallthru
          _
        %s194 = sand.u32 %s75, 1
        %s195 = scalar_lea.sflag [#allocation5], %s194
        %s196 = sand.u32 %s75, 1
        %s197 = smul.addr %s196, 6
        %s198 = scalar_lea.vmem [#allocation4], %s197
        // Predicated region
        $region37: #{cls_mlp_head.1} parent=31 // pred_check
          %p199 = pneg %p88
        $region38: #{cls_mlp_head.1} parent=31 // pred_check_branch
          %201 = sbr.rel (%p199) target = $region40
        $region39: #{cls_mlp_head.1} parent=31 // pred_region
          %203 = dma.done %s195, 96
        $region40: #{cls_mlp_head.1} parent=31 // pred_fallthru
          _
        %p204 = pneg %p36
        %p205 = pneg %p33
        %s206 = sand.u32 %s49, 1
        %s207 = scalar_lea.sflag [#allocation3], %s206
        %s208 = sand.u32 %s49, 1
        %s209 = smul.addr %s208, 4608
        %s210 = scalar_lea.vmem [#allocation2], %s209
        %p211 = pneg %p62
        %p212 = pneg %p59
        %s213 = sand.u32 %s75, 1
        %s214 = scalar_lea.sflag [#allocation5], %s213
        %s215 = sand.u32 %s75, 1
        %s216 = smul.addr %s215, 6
        %s217 = scalar_lea.vmem [#allocation4], %s216
        %p218 = pneg %p88
        %p219 = pneg %p85
        %p220 = pneg %p114
        %p221 = pneg %p111
        %s222 = smul.u32 6, %s20
        %p223 = scmp.lt.s32.totalorder %s222, 11
        %s224 = scalar_select %p223, %s222, 11
        %s225 = smul.addr %s224, 2
        %s226 = scalar_lea.vmem %s3, %s225
        %s227 = smul.u32 6, %s20
        %s228 = smul.u32 6, %s20
        %s229 = smul.u32 6, %s20
        %p230 = scmp.lt.s32.totalorder %s229, 11
        %s231 = scalar_select %p230, %s229, 11
        %s232 = smul.addr %s231, 2
        %s233 = scalar_lea.vmem %s3, %s232
        %s234 = smul.u32 6, %s20
        %v235 = vld [vmem:[%s0] sm:$0xff]
        %v236 = vld [vmem:[%s0 + $0x8] sm:$0xf]
        %v237 = vld [vmem:[%s188] sm:$0xff]
        %v238 = vld [vmem:[%s188 + $0x8] sm:$0xff]
        %v239 = vld [vmem:[%s188 + $0x10] sm:$0xff]
        %v240 = vld [vmem:[%s188 + $0x18] sm:$0xff]
        %v241 = vld [vmem:[%s188 + $0x20] sm:$0xff]
        %v242 = vld [vmem:[%s188 + $0x28] sm:$0xff]
        %v243 = vld [vmem:[%s188 + $0x30] sm:$0xff]
        %v244 = vld [vmem:[%s188 + $0x38] sm:$0xff]
        %v245 = vld [vmem:[%s188 + $0x40] sm:$0xff]
        %v246 = vld [vmem:[%s188 + $0x48] sm:$0xff]
        %v247 = vld [vmem:[%s188 + $0x50] sm:$0xff]
        %v248 = vld [vmem:[%s188 + $0x58] sm:$0xff]
        %v249 = vld [vmem:[%s188 + $0x60] sm:$0xff]
        %v250 = vld [vmem:[%s188 + $0x68] sm:$0xff]
        %v251 = vld [vmem:[%s188 + $0x70] sm:$0xff]
        %v252 = vld [vmem:[%s188 + $0x78] sm:$0xff]
        %v253 = vld [vmem:[%s188 + $0x80] sm:$0xff]
        %v254 = vld [vmem:[%s188 + $0x88] sm:$0xff]
        %v255 = vld [vmem:[%s188 + $0x90] sm:$0xff]
        %v256 = vld [vmem:[%s188 + $0x98] sm:$0xff]
        %v257 = vld [vmem:[%s188 + $0xa0] sm:$0xff]
        %v258 = vld [vmem:[%s188 + $0xa8] sm:$0xff]
        %v259 = vld [vmem:[%s188 + $0xb0] sm:$0xff]
        %v260 = vld [vmem:[%s188 + $0xb8] sm:$0xff]
        %v261 = vld [vmem:[%s188 + $0xc0] sm:$0xff]
        %v262 = vld [vmem:[%s188 + $0xc8] sm:$0xff]
        %v263 = vld [vmem:[%s188 + $0xd0] sm:$0xff]
        %v264 = vld [vmem:[%s188 + $0xd8] sm:$0xff]
        %v265 = vld [vmem:[%s188 + $0xe0] sm:$0xff]
        %v266 = vld [vmem:[%s188 + $0xe8] sm:$0xff]
        %v267 = vld [vmem:[%s188 + $0xf0] sm:$0xff]
        %v268 = vld [vmem:[%s188 + $0xf8] sm:$0xff]
        %v269 = vld [vmem:[%s188 + $0x100] sm:$0xff]
        %v270 = vld [vmem:[%s188 + $0x108] sm:$0xff]
        %v271 = vld [vmem:[%s188 + $0x110] sm:$0xff]
        %v272 = vld [vmem:[%s188 + $0x118] sm:$0xff]
        %v273 = vld [vmem:[%s188 + $0x120] sm:$0xff]
        %v274 = vld [vmem:[%s188 + $0x128] sm:$0xff]
        %v275 = vld [vmem:[%s188 + $0x130] sm:$0xff]
        %v276 = vld [vmem:[%s188 + $0x138] sm:$0xff]
        %v277 = vld [vmem:[%s188 + $0x140] sm:$0xff]
        %v278 = vld [vmem:[%s188 + $0x148] sm:$0xff]
        %v279 = vld [vmem:[%s188 + $0x150] sm:$0xff]
        %v280 = vld [vmem:[%s188 + $0x158] sm:$0xff]
        %v281 = vld [vmem:[%s188 + $0x160] sm:$0xff]
        %v282 = vld [vmem:[%s188 + $0x168] sm:$0xff]
        %v283 = vld [vmem:[%s188 + $0x170] sm:$0xff]
        %v284 = vld [vmem:[%s188 + $0x178] sm:$0xff]
        %v285 = vld [vmem:[%s188 + $0x180] sm:$0xff]
        %v286 = vld [vmem:[%s188 + $0x188] sm:$0xff]
        %v287 = vld [vmem:[%s188 + $0x190] sm:$0xff]
        %v288 = vld [vmem:[%s188 + $0x198] sm:$0xff]
        %v289 = vld [vmem:[%s188 + $0x1a0] sm:$0xff]
        %v290 = vld [vmem:[%s188 + $0x1a8] sm:$0xff]
        %v291 = vld [vmem:[%s188 + $0x1b0] sm:$0xff]
        %v292 = vld [vmem:[%s188 + $0x1b8] sm:$0xff]
        %v293 = vld [vmem:[%s188 + $0x1c0] sm:$0xff]
        %v294 = vld [vmem:[%s188 + $0x1c8] sm:$0xff]
        %v295 = vld [vmem:[%s188 + $0x1d0] sm:$0xff]
        %v296 = vld [vmem:[%s188 + $0x1d8] sm:$0xff]
        %v297 = vld [vmem:[%s188 + $0x1e0] sm:$0xff]
        %v298 = vld [vmem:[%s188 + $0x1e8] sm:$0xff]
        %v299 = vld [vmem:[%s188 + $0x1f0] sm:$0xff]
        %v300 = vld [vmem:[%s188 + $0x1f8] sm:$0xff]
        %v301 = vld [vmem:[%s188 + $0x200] sm:$0xff]
        %v302 = vld [vmem:[%s188 + $0x208] sm:$0xff]
        %v303 = vld [vmem:[%s188 + $0x210] sm:$0xff]
        %v304 = vld [vmem:[%s188 + $0x218] sm:$0xff]
        %v305 = vld [vmem:[%s188 + $0x220] sm:$0xff]
        %v306 = vld [vmem:[%s188 + $0x228] sm:$0xff]
        %v307 = vld [vmem:[%s188 + $0x230] sm:$0xff]
        %v308 = vld [vmem:[%s188 + $0x238] sm:$0xff]
        %v309 = vld [vmem:[%s188 + $0x240] sm:$0xff]
        %v310 = vld [vmem:[%s188 + $0x248] sm:$0xff]
        %v311 = vld [vmem:[%s188 + $0x250] sm:$0xff]
        %v312 = vld [vmem:[%s188 + $0x258] sm:$0xff]
        %v313 = vld [vmem:[%s188 + $0x260] sm:$0xff]
        %v314 = vld [vmem:[%s188 + $0x268] sm:$0xff]
        %v315 = vld [vmem:[%s188 + $0x270] sm:$0xff]
        %v316 = vld [vmem:[%s188 + $0x278] sm:$0xff]
        %v317 = vld [vmem:[%s188 + $0x280] sm:$0xff]
        %v318 = vld [vmem:[%s188 + $0x288] sm:$0xff]
        %v319 = vld [vmem:[%s188 + $0x290] sm:$0xff]
        %v320 = vld [vmem:[%s188 + $0x298] sm:$0xff]
        %v321 = vld [vmem:[%s188 + $0x2a0] sm:$0xff]
        %v322 = vld [vmem:[%s188 + $0x2a8] sm:$0xff]
        %v323 = vld [vmem:[%s188 + $0x2b0] sm:$0xff]
        %v324 = vld [vmem:[%s188 + $0x2b8] sm:$0xff]
        %v325 = vld [vmem:[%s188 + $0x2c0] sm:$0xff]
        %v326 = vld [vmem:[%s188 + $0x2c8] sm:$0xff]
        %v327 = vld [vmem:[%s188 + $0x2d0] sm:$0xff]
        %v328 = vld [vmem:[%s188 + $0x2d8] sm:$0xff]
        %v329 = vld [vmem:[%s188 + $0x2e0] sm:$0xff]
        %v330 = vld [vmem:[%s188 + $0x2e8] sm:$0xff]
        %v331 = vld [vmem:[%s188 + $0x2f0] sm:$0xff]
        %v332 = vld [vmem:[%s188 + $0x2f8] sm:$0xff]
        %v333 = vld [vmem:[%s188 + $0x300] sm:$0xff]
        %v334 = vld [vmem:[%s188 + $0x308] sm:$0xff]
        %v335 = vld [vmem:[%s188 + $0x310] sm:$0xff]
        %v336 = vld [vmem:[%s188 + $0x318] sm:$0xff]
        %v337 = vld [vmem:[%s188 + $0x320] sm:$0xff]
        %v338 = vld [vmem:[%s188 + $0x328] sm:$0xff]
        %v339 = vld [vmem:[%s188 + $0x330] sm:$0xff]
        %v340 = vld [vmem:[%s188 + $0x338] sm:$0xff]
        %v341 = vld [vmem:[%s188 + $0x340] sm:$0xff]
        %v342 = vld [vmem:[%s188 + $0x348] sm:$0xff]
        %v343 = vld [vmem:[%s188 + $0x350] sm:$0xff]
        %v344 = vld [vmem:[%s188 + $0x358] sm:$0xff]
        %v345 = vld [vmem:[%s188 + $0x360] sm:$0xff]
        %v346 = vld [vmem:[%s188 + $0x368] sm:$0xff]
        %v347 = vld [vmem:[%s188 + $0x370] sm:$0xff]
        %v348 = vld [vmem:[%s188 + $0x378] sm:$0xff]
        %v349 = vld [vmem:[%s188 + $0x380] sm:$0xff]
        %v350 = vld [vmem:[%s188 + $0x388] sm:$0xff]
        %v351 = vld [vmem:[%s188 + $0x390] sm:$0xff]
        %v352 = vld [vmem:[%s188 + $0x398] sm:$0xff]
        %v353 = vld [vmem:[%s188 + $0x3a0] sm:$0xff]
        %v354 = vld [vmem:[%s188 + $0x3a8] sm:$0xff]
        %v355 = vld [vmem:[%s188 + $0x3b0] sm:$0xff]
        %v356 = vld [vmem:[%s188 + $0x3b8] sm:$0xff]
        %v357 = vld [vmem:[%s188 + $0x3c0] sm:$0xff]
        %v358 = vld [vmem:[%s188 + $0x3c8] sm:$0xff]
        %v359 = vld [vmem:[%s188 + $0x3d0] sm:$0xff]
        %v360 = vld [vmem:[%s188 + $0x3d8] sm:$0xff]
        %v361 = vld [vmem:[%s188 + $0x3e0] sm:$0xff]
        %v362 = vld [vmem:[%s188 + $0x3e8] sm:$0xff]
        %v363 = vld [vmem:[%s188 + $0x3f0] sm:$0xff]
        %v364 = vld [vmem:[%s188 + $0x3f8] sm:$0xff]
        %v365 = vld [vmem:[%s188 + $0x400] sm:$0xff]
        %v366 = vld [vmem:[%s188 + $0x408] sm:$0xff]
        %v367 = vld [vmem:[%s188 + $0x410] sm:$0xff]
        %v368 = vld [vmem:[%s188 + $0x418] sm:$0xff]
        %v369 = vld [vmem:[%s188 + $0x420] sm:$0xff]
        %v370 = vld [vmem:[%s188 + $0x428] sm:$0xff]
        %v371 = vld [vmem:[%s188 + $0x430] sm:$0xff]
        %v372 = vld [vmem:[%s188 + $0x438] sm:$0xff]
        %v373 = vld [vmem:[%s188 + $0x440] sm:$0xff]
        %v374 = vld [vmem:[%s188 + $0x448] sm:$0xff]
        %v375 = vld [vmem:[%s188 + $0x450] sm:$0xff]
        %v376 = vld [vmem:[%s188 + $0x458] sm:$0xff]
        %v377 = vld [vmem:[%s188 + $0x460] sm:$0xff]
        %v378 = vld [vmem:[%s188 + $0x468] sm:$0xff]
        %v379 = vld [vmem:[%s188 + $0x470] sm:$0xff]
        %v380 = vld [vmem:[%s188 + $0x478] sm:$0xff]
        %v381 = vld [vmem:[%s188 + $0x480] sm:$0xff]
        %v382 = vld [vmem:[%s188 + $0x488] sm:$0xff]
        %v383 = vld [vmem:[%s188 + $0x490] sm:$0xff]
        %v384 = vld [vmem:[%s188 + $0x498] sm:$0xff]
        %v385 = vld [vmem:[%s188 + $0x4a0] sm:$0xff]
        %v386 = vld [vmem:[%s188 + $0x4a8] sm:$0xff]
        %v387 = vld [vmem:[%s188 + $0x4b0] sm:$0xff]
        %v388 = vld [vmem:[%s188 + $0x4b8] sm:$0xff]
        %v389 = vld [vmem:[%s188 + $0x4c0] sm:$0xff]
        %v390 = vld [vmem:[%s188 + $0x4c8] sm:$0xff]
        %v391 = vld [vmem:[%s188 + $0x4d0] sm:$0xff]
        %v392 = vld [vmem:[%s188 + $0x4d8] sm:$0xff]
        %v393 = vld [vmem:[%s188 + $0x4e0] sm:$0xff]
        %v394 = vld [vmem:[%s188 + $0x4e8] sm:$0xff]
        %v395 = vld [vmem:[%s188 + $0x4f0] sm:$0xff]
        %v396 = vld [vmem:[%s188 + $0x4f8] sm:$0xff]
        %v397 = vld [vmem:[%s188 + $0x500] sm:$0xff]
        %v398 = vld [vmem:[%s188 + $0x508] sm:$0xff]
        %v399 = vld [vmem:[%s188 + $0x510] sm:$0xff]
        %v400 = vld [vmem:[%s188 + $0x518] sm:$0xff]
        %v401 = vld [vmem:[%s188 + $0x520] sm:$0xff]
        %v402 = vld [vmem:[%s188 + $0x528] sm:$0xff]
        %v403 = vld [vmem:[%s188 + $0x530] sm:$0xff]
        %v404 = vld [vmem:[%s188 + $0x538] sm:$0xff]
        %v405 = vld [vmem:[%s188 + $0x540] sm:$0xff]
        %v406 = vld [vmem:[%s188 + $0x548] sm:$0xff]
        %v407 = vld [vmem:[%s188 + $0x550] sm:$0xff]
        %v408 = vld [vmem:[%s188 + $0x558] sm:$0xff]
        %v409 = vld [vmem:[%s188 + $0x560] sm:$0xff]
        %v410 = vld [vmem:[%s188 + $0x568] sm:$0xff]
        %v411 = vld [vmem:[%s188 + $0x570] sm:$0xff]
        %v412 = vld [vmem:[%s188 + $0x578] sm:$0xff]
        %v413 = vld [vmem:[%s188 + $0x580] sm:$0xff]
        %v414 = vld [vmem:[%s188 + $0x588] sm:$0xff]
        %v415 = vld [vmem:[%s188 + $0x590] sm:$0xff]
        %v416 = vld [vmem:[%s188 + $0x598] sm:$0xff]
        %v417 = vld [vmem:[%s188 + $0x5a0] sm:$0xff]
        %v418 = vld [vmem:[%s188 + $0x5a8] sm:$0xff]
        %v419 = vld [vmem:[%s188 + $0x5b0] sm:$0xff]
        %v420 = vld [vmem:[%s188 + $0x5b8] sm:$0xff]
        %v421 = vld [vmem:[%s188 + $0x5c0] sm:$0xff]
        %v422 = vld [vmem:[%s188 + $0x5c8] sm:$0xff]
        %v423 = vld [vmem:[%s188 + $0x5d0] sm:$0xff]
        %v424 = vld [vmem:[%s188 + $0x5d8] sm:$0xff]
        %v425 = vld [vmem:[%s188 + $0x5e0] sm:$0xff]
        %v426 = vld [vmem:[%s188 + $0x5e8] sm:$0xff]
        %v427 = vld [vmem:[%s188 + $0x5f0] sm:$0xff]
        %v428 = vld [vmem:[%s188 + $0x5f8] sm:$0xff]
        %v429 = vld [vmem:[%s188 + $0x600] sm:$0xff]
        %v430 = vld [vmem:[%s188 + $0x608] sm:$0xff]
        %v431 = vld [vmem:[%s188 + $0x610] sm:$0xff]
        %v432 = vld [vmem:[%s188 + $0x618] sm:$0xff]
        %v433 = vld [vmem:[%s188 + $0x620] sm:$0xff]
        %v434 = vld [vmem:[%s188 + $0x628] sm:$0xff]
        %v435 = vld [vmem:[%s188 + $0x630] sm:$0xff]
        %v436 = vld [vmem:[%s188 + $0x638] sm:$0xff]
        %v437 = vld [vmem:[%s188 + $0x640] sm:$0xff]
        %v438 = vld [vmem:[%s188 + $0x648] sm:$0xff]
        %v439 = vld [vmem:[%s188 + $0x650] sm:$0xff]
        %v440 = vld [vmem:[%s188 + $0x658] sm:$0xff]
        %v441 = vld [vmem:[%s188 + $0x660] sm:$0xff]
        %v442 = vld [vmem:[%s188 + $0x668] sm:$0xff]
        %v443 = vld [vmem:[%s188 + $0x670] sm:$0xff]
        %v444 = vld [vmem:[%s188 + $0x678] sm:$0xff]
        %v445 = vld [vmem:[%s188 + $0x680] sm:$0xff]
        %v446 = vld [vmem:[%s188 + $0x688] sm:$0xff]
        %v447 = vld [vmem:[%s188 + $0x690] sm:$0xff]
        %v448 = vld [vmem:[%s188 + $0x698] sm:$0xff]
        %v449 = vld [vmem:[%s188 + $0x6a0] sm:$0xff]
        %v450 = vld [vmem:[%s188 + $0x6a8] sm:$0xff]
        %v451 = vld [vmem:[%s188 + $0x6b0] sm:$0xff]
        %v452 = vld [vmem:[%s188 + $0x6b8] sm:$0xff]
        %v453 = vld [vmem:[%s188 + $0x6c0] sm:$0xff]
        %v454 = vld [vmem:[%s188 + $0x6c8] sm:$0xff]
        %v455 = vld [vmem:[%s188 + $0x6d0] sm:$0xff]
        %v456 = vld [vmem:[%s188 + $0x6d8] sm:$0xff]
        %v457 = vld [vmem:[%s188 + $0x6e0] sm:$0xff]
        %v458 = vld [vmem:[%s188 + $0x6e8] sm:$0xff]
        %v459 = vld [vmem:[%s188 + $0x6f0] sm:$0xff]
        %v460 = vld [vmem:[%s188 + $0x6f8] sm:$0xff]
        %v461 = vld [vmem:[%s188 + $0x700] sm:$0xff]
        %v462 = vld [vmem:[%s188 + $0x708] sm:$0xff]
        %v463 = vld [vmem:[%s188 + $0x710] sm:$0xff]
        %v464 = vld [vmem:[%s188 + $0x718] sm:$0xff]
        %v465 = vld [vmem:[%s188 + $0x720] sm:$0xff]
        %v466 = vld [vmem:[%s188 + $0x728] sm:$0xff]
        %v467 = vld [vmem:[%s188 + $0x730] sm:$0xff]
        %v468 = vld [vmem:[%s188 + $0x738] sm:$0xff]
        %v469 = vld [vmem:[%s188 + $0x740] sm:$0xff]
        %v470 = vld [vmem:[%s188 + $0x748] sm:$0xff]
        %v471 = vld [vmem:[%s188 + $0x750] sm:$0xff]
        %v472 = vld [vmem:[%s188 + $0x758] sm:$0xff]
        %v473 = vld [vmem:[%s188 + $0x760] sm:$0xff]
        %v474 = vld [vmem:[%s188 + $0x768] sm:$0xff]
        %v475 = vld [vmem:[%s188 + $0x770] sm:$0xff]
        %v476 = vld [vmem:[%s188 + $0x778] sm:$0xff]
        %v477 = vld [vmem:[%s188 + $0x780] sm:$0xff]
        %v478 = vld [vmem:[%s188 + $0x788] sm:$0xff]
        %v479 = vld [vmem:[%s188 + $0x790] sm:$0xff]
        %v480 = vld [vmem:[%s188 + $0x798] sm:$0xff]
        %v481 = vld [vmem:[%s188 + $0x7a0] sm:$0xff]
        %v482 = vld [vmem:[%s188 + $0x7a8] sm:$0xff]
        %v483 = vld [vmem:[%s188 + $0x7b0] sm:$0xff]
        %v484 = vld [vmem:[%s188 + $0x7b8] sm:$0xff]
        %v485 = vld [vmem:[%s188 + $0x7c0] sm:$0xff]
        %v486 = vld [vmem:[%s188 + $0x7c8] sm:$0xff]
        %v487 = vld [vmem:[%s188 + $0x7d0] sm:$0xff]
        %v488 = vld [vmem:[%s188 + $0x7d8] sm:$0xff]
        %v489 = vld [vmem:[%s188 + $0x7e0] sm:$0xff]
        %v490 = vld [vmem:[%s188 + $0x7e8] sm:$0xff]
        %v491 = vld [vmem:[%s188 + $0x7f0] sm:$0xff]
        %v492 = vld [vmem:[%s188 + $0x7f8] sm:$0xff]
        %v493 = vld [vmem:[%s188 + $0x800] sm:$0xff]
        %v494 = vld [vmem:[%s188 + $0x808] sm:$0xff]
        %v495 = vld [vmem:[%s188 + $0x810] sm:$0xff]
        %v496 = vld [vmem:[%s188 + $0x818] sm:$0xff]
        %v497 = vld [vmem:[%s188 + $0x820] sm:$0xff]
        %v498 = vld [vmem:[%s188 + $0x828] sm:$0xff]
        %v499 = vld [vmem:[%s188 + $0x830] sm:$0xff]
        %v500 = vld [vmem:[%s188 + $0x838] sm:$0xff]
        %v501 = vld [vmem:[%s188 + $0x840] sm:$0xff]
        %v502 = vld [vmem:[%s188 + $0x848] sm:$0xff]
        %v503 = vld [vmem:[%s188 + $0x850] sm:$0xff]
        %v504 = vld [vmem:[%s188 + $0x858] sm:$0xff]
        %v505 = vld [vmem:[%s188 + $0x860] sm:$0xff]
        %v506 = vld [vmem:[%s188 + $0x868] sm:$0xff]
        %v507 = vld [vmem:[%s188 + $0x870] sm:$0xff]
        %v508 = vld [vmem:[%s188 + $0x878] sm:$0xff]
        %v509 = vld [vmem:[%s188 + $0x880] sm:$0xff]
        %v510 = vld [vmem:[%s188 + $0x888] sm:$0xff]
        %v511 = vld [vmem:[%s188 + $0x890] sm:$0xff]
        %v512 = vld [vmem:[%s188 + $0x898] sm:$0xff]
        %v513 = vld [vmem:[%s188 + $0x8a0] sm:$0xff]
        %v514 = vld [vmem:[%s188 + $0x8a8] sm:$0xff]
        %v515 = vld [vmem:[%s188 + $0x8b0] sm:$0xff]
        %v516 = vld [vmem:[%s188 + $0x8b8] sm:$0xff]
        %v517 = vld [vmem:[%s188 + $0x8c0] sm:$0xff]
        %v518 = vld [vmem:[%s188 + $0x8c8] sm:$0xff]
        %v519 = vld [vmem:[%s188 + $0x8d0] sm:$0xff]
        %v520 = vld [vmem:[%s188 + $0x8d8] sm:$0xff]
        %v521 = vld [vmem:[%s188 + $0x8e0] sm:$0xff]
        %v522 = vld [vmem:[%s188 + $0x8e8] sm:$0xff]
        %v523 = vld [vmem:[%s188 + $0x8f0] sm:$0xff]
        %v524 = vld [vmem:[%s188 + $0x8f8] sm:$0xff]
        %v525 = vld [vmem:[%s188 + $0x900] sm:$0xff]
        %v526 = vld [vmem:[%s188 + $0x908] sm:$0xff]
        %v527 = vld [vmem:[%s188 + $0x910] sm:$0xff]
        %v528 = vld [vmem:[%s188 + $0x918] sm:$0xff]
        %v529 = vld [vmem:[%s188 + $0x920] sm:$0xff]
        %v530 = vld [vmem:[%s188 + $0x928] sm:$0xff]
        %v531 = vld [vmem:[%s188 + $0x930] sm:$0xff]
        %v532 = vld [vmem:[%s188 + $0x938] sm:$0xff]
        %v533 = vld [vmem:[%s188 + $0x940] sm:$0xff]
        %v534 = vld [vmem:[%s188 + $0x948] sm:$0xff]
        %v535 = vld [vmem:[%s188 + $0x950] sm:$0xff]
        %v536 = vld [vmem:[%s188 + $0x958] sm:$0xff]
        %v537 = vld [vmem:[%s188 + $0x960] sm:$0xff]
        %v538 = vld [vmem:[%s188 + $0x968] sm:$0xff]
        %v539 = vld [vmem:[%s188 + $0x970] sm:$0xff]
        %v540 = vld [vmem:[%s188 + $0x978] sm:$0xff]
        %v541 = vld [vmem:[%s188 + $0x980] sm:$0xff]
        %v542 = vld [vmem:[%s188 + $0x988] sm:$0xff]
        %v543 = vld [vmem:[%s188 + $0x990] sm:$0xff]
        %v544 = vld [vmem:[%s188 + $0x998] sm:$0xff]
        %v545 = vld [vmem:[%s188 + $0x9a0] sm:$0xff]
        %v546 = vld [vmem:[%s188 + $0x9a8] sm:$0xff]
        %v547 = vld [vmem:[%s188 + $0x9b0] sm:$0xff]
        %v548 = vld [vmem:[%s188 + $0x9b8] sm:$0xff]
        %v549 = vld [vmem:[%s188 + $0x9c0] sm:$0xff]
        %v550 = vld [vmem:[%s188 + $0x9c8] sm:$0xff]
        %v551 = vld [vmem:[%s188 + $0x9d0] sm:$0xff]
        %v552 = vld [vmem:[%s188 + $0x9d8] sm:$0xff]
        %v553 = vld [vmem:[%s188 + $0x9e0] sm:$0xff]
        %v554 = vld [vmem:[%s188 + $0x9e8] sm:$0xff]
        %v555 = vld [vmem:[%s188 + $0x9f0] sm:$0xff]
        %v556 = vld [vmem:[%s188 + $0x9f8] sm:$0xff]
        %v557 = vld [vmem:[%s188 + $0xa00] sm:$0xff]
        %v558 = vld [vmem:[%s188 + $0xa08] sm:$0xff]
        %v559 = vld [vmem:[%s188 + $0xa10] sm:$0xff]
        %v560 = vld [vmem:[%s188 + $0xa18] sm:$0xff]
        %v561 = vld [vmem:[%s188 + $0xa20] sm:$0xff]
        %v562 = vld [vmem:[%s188 + $0xa28] sm:$0xff]
        %v563 = vld [vmem:[%s188 + $0xa30] sm:$0xff]
        %v564 = vld [vmem:[%s188 + $0xa38] sm:$0xff]
        %v565 = vld [vmem:[%s188 + $0xa40] sm:$0xff]
        %v566 = vld [vmem:[%s188 + $0xa48] sm:$0xff]
        %v567 = vld [vmem:[%s188 + $0xa50] sm:$0xff]
        %v568 = vld [vmem:[%s188 + $0xa58] sm:$0xff]
        %v569 = vld [vmem:[%s188 + $0xa60] sm:$0xff]
        %v570 = vld [vmem:[%s188 + $0xa68] sm:$0xff]
        %v571 = vld [vmem:[%s188 + $0xa70] sm:$0xff]
        %v572 = vld [vmem:[%s188 + $0xa78] sm:$0xff]
        %v573 = vld [vmem:[%s188 + $0xa80] sm:$0xff]
        %v574 = vld [vmem:[%s188 + $0xa88] sm:$0xff]
        %v575 = vld [vmem:[%s188 + $0xa90] sm:$0xff]
        %v576 = vld [vmem:[%s188 + $0xa98] sm:$0xff]
        %v577 = vld [vmem:[%s188 + $0xaa0] sm:$0xff]
        %v578 = vld [vmem:[%s188 + $0xaa8] sm:$0xff]
        %v579 = vld [vmem:[%s188 + $0xab0] sm:$0xff]
        %v580 = vld [vmem:[%s188 + $0xab8] sm:$0xff]
        %v581 = vld [vmem:[%s188 + $0xac0] sm:$0xff]
        %v582 = vld [vmem:[%s188 + $0xac8] sm:$0xff]
        %v583 = vld [vmem:[%s188 + $0xad0] sm:$0xff]
        %v584 = vld [vmem:[%s188 + $0xad8] sm:$0xff]
        %v585 = vld [vmem:[%s188 + $0xae0] sm:$0xff]
        %v586 = vld [vmem:[%s188 + $0xae8] sm:$0xff]
        %v587 = vld [vmem:[%s188 + $0xaf0] sm:$0xff]
        %v588 = vld [vmem:[%s188 + $0xaf8] sm:$0xff]
        %v589 = vld [vmem:[%s188 + $0xb00] sm:$0xff]
        %v590 = vld [vmem:[%s188 + $0xb08] sm:$0xff]
        %v591 = vld [vmem:[%s188 + $0xb10] sm:$0xff]
        %v592 = vld [vmem:[%s188 + $0xb18] sm:$0xff]
        %v593 = vld [vmem:[%s188 + $0xb20] sm:$0xff]
        %v594 = vld [vmem:[%s188 + $0xb28] sm:$0xff]
        %v595 = vld [vmem:[%s188 + $0xb30] sm:$0xff]
        %v596 = vld [vmem:[%s188 + $0xb38] sm:$0xff]
        %v597 = vld [vmem:[%s188 + $0xb40] sm:$0xff]
        %v598 = vld [vmem:[%s188 + $0xb48] sm:$0xff]
        %v599 = vld [vmem:[%s188 + $0xb50] sm:$0xff]
        %v600 = vld [vmem:[%s188 + $0xb58] sm:$0xff]
        %v601 = vld [vmem:[%s188 + $0xb60] sm:$0xff]
        %v602 = vld [vmem:[%s188 + $0xb68] sm:$0xff]
        %v603 = vld [vmem:[%s188 + $0xb70] sm:$0xff]
        %v604 = vld [vmem:[%s188 + $0xb78] sm:$0xff]
        %v605 = vld [vmem:[%s188 + $0xb80] sm:$0xff]
        %v606 = vld [vmem:[%s188 + $0xb88] sm:$0xff]
        %v607 = vld [vmem:[%s188 + $0xb90] sm:$0xff]
        %v608 = vld [vmem:[%s188 + $0xb98] sm:$0xff]
        %v609 = vld [vmem:[%s188 + $0xba0] sm:$0xff]
        %v610 = vld [vmem:[%s188 + $0xba8] sm:$0xff]
        %v611 = vld [vmem:[%s188 + $0xbb0] sm:$0xff]
        %v612 = vld [vmem:[%s188 + $0xbb8] sm:$0xff]
        %v613 = vld [vmem:[%s188 + $0xbc0] sm:$0xff]
        %v614 = vld [vmem:[%s188 + $0xbc8] sm:$0xff]
        %v615 = vld [vmem:[%s188 + $0xbd0] sm:$0xff]
        %v616 = vld [vmem:[%s188 + $0xbd8] sm:$0xff]
        %v617 = vld [vmem:[%s188 + $0xbe0] sm:$0xff]
        %v618 = vld [vmem:[%s188 + $0xbe8] sm:$0xff]
        %v619 = vld [vmem:[%s188 + $0xbf0] sm:$0xff]
        %v620 = vld [vmem:[%s188 + $0xbf8] sm:$0xff]
        %v621 = vld [vmem:[%s188 + $0xc00] sm:$0xff]
        %v622 = vld [vmem:[%s188 + $0xc08] sm:$0xff]
        %v623 = vld [vmem:[%s188 + $0xc10] sm:$0xff]
        %v624 = vld [vmem:[%s188 + $0xc18] sm:$0xff]
        %v625 = vld [vmem:[%s188 + $0xc20] sm:$0xff]
        %v626 = vld [vmem:[%s188 + $0xc28] sm:$0xff]
        %v627 = vld [vmem:[%s188 + $0xc30] sm:$0xff]
        %v628 = vld [vmem:[%s188 + $0xc38] sm:$0xff]
        %v629 = vld [vmem:[%s188 + $0xc40] sm:$0xff]
        %v630 = vld [vmem:[%s188 + $0xc48] sm:$0xff]
        %v631 = vld [vmem:[%s188 + $0xc50] sm:$0xff]
        %v632 = vld [vmem:[%s188 + $0xc58] sm:$0xff]
        %v633 = vld [vmem:[%s188 + $0xc60] sm:$0xff]
        %v634 = vld [vmem:[%s188 + $0xc68] sm:$0xff]
        %v635 = vld [vmem:[%s188 + $0xc70] sm:$0xff]
        %v636 = vld [vmem:[%s188 + $0xc78] sm:$0xff]
        %v637 = vld [vmem:[%s188 + $0xc80] sm:$0xff]
        %v638 = vld [vmem:[%s188 + $0xc88] sm:$0xff]
        %v639 = vld [vmem:[%s188 + $0xc90] sm:$0xff]
        %v640 = vld [vmem:[%s188 + $0xc98] sm:$0xff]
        %v641 = vld [vmem:[%s188 + $0xca0] sm:$0xff]
        %v642 = vld [vmem:[%s188 + $0xca8] sm:$0xff]
        %v643 = vld [vmem:[%s188 + $0xcb0] sm:$0xff]
        %v644 = vld [vmem:[%s188 + $0xcb8] sm:$0xff]
        %v645 = vld [vmem:[%s188 + $0xcc0] sm:$0xff]
        %v646 = vld [vmem:[%s188 + $0xcc8] sm:$0xff]
        %v647 = vld [vmem:[%s188 + $0xcd0] sm:$0xff]
        %v648 = vld [vmem:[%s188 + $0xcd8] sm:$0xff]
        %v649 = vld [vmem:[%s188 + $0xce0] sm:$0xff]
        %v650 = vld [vmem:[%s188 + $0xce8] sm:$0xff]
        %v651 = vld [vmem:[%s188 + $0xcf0] sm:$0xff]
        %v652 = vld [vmem:[%s188 + $0xcf8] sm:$0xff]
        %v653 = vld [vmem:[%s188 + $0xd00] sm:$0xff]
        %v654 = vld [vmem:[%s188 + $0xd08] sm:$0xff]
        %v655 = vld [vmem:[%s188 + $0xd10] sm:$0xff]
        %v656 = vld [vmem:[%s188 + $0xd18] sm:$0xff]
        %v657 = vld [vmem:[%s188 + $0xd20] sm:$0xff]
        %v658 = vld [vmem:[%s188 + $0xd28] sm:$0xff]
        %v659 = vld [vmem:[%s188 + $0xd30] sm:$0xff]
        %v660 = vld [vmem:[%s188 + $0xd38] sm:$0xff]
        %v661 = vld [vmem:[%s188 + $0xd40] sm:$0xff]
        %v662 = vld [vmem:[%s188 + $0xd48] sm:$0xff]
        %v663 = vld [vmem:[%s188 + $0xd50] sm:$0xff]
        %v664 = vld [vmem:[%s188 + $0xd58] sm:$0xff]
        %v665 = vld [vmem:[%s188 + $0xd60] sm:$0xff]
        %v666 = vld [vmem:[%s188 + $0xd68] sm:$0xff]
        %v667 = vld [vmem:[%s188 + $0xd70] sm:$0xff]
        %v668 = vld [vmem:[%s188 + $0xd78] sm:$0xff]
        %v669 = vld [vmem:[%s188 + $0xd80] sm:$0xff]
        %v670 = vld [vmem:[%s188 + $0xd88] sm:$0xff]
        %v671 = vld [vmem:[%s188 + $0xd90] sm:$0xff]
        %v672 = vld [vmem:[%s188 + $0xd98] sm:$0xff]
        %v673 = vld [vmem:[%s188 + $0xda0] sm:$0xff]
        %v674 = vld [vmem:[%s188 + $0xda8] sm:$0xff]
        %v675 = vld [vmem:[%s188 + $0xdb0] sm:$0xff]
        %v676 = vld [vmem:[%s188 + $0xdb8] sm:$0xff]
        %v677 = vld [vmem:[%s188 + $0xdc0] sm:$0xff]
        %v678 = vld [vmem:[%s188 + $0xdc8] sm:$0xff]
        %v679 = vld [vmem:[%s188 + $0xdd0] sm:$0xff]
        %v680 = vld [vmem:[%s188 + $0xdd8] sm:$0xff]
        %v681 = vld [vmem:[%s188 + $0xde0] sm:$0xff]
        %v682 = vld [vmem:[%s188 + $0xde8] sm:$0xff]
        %v683 = vld [vmem:[%s188 + $0xdf0] sm:$0xff]
        %v684 = vld [vmem:[%s188 + $0xdf8] sm:$0xff]
        %v685 = vld [vmem:[%s188 + $0xe00] sm:$0xff]
        %v686 = vld [vmem:[%s188 + $0xe08] sm:$0xff]
        %v687 = vld [vmem:[%s188 + $0xe10] sm:$0xff]
        %v688 = vld [vmem:[%s188 + $0xe18] sm:$0xff]
        %v689 = vld [vmem:[%s188 + $0xe20] sm:$0xff]
        %v690 = vld [vmem:[%s188 + $0xe28] sm:$0xff]
        %v691 = vld [vmem:[%s188 + $0xe30] sm:$0xff]
        %v692 = vld [vmem:[%s188 + $0xe38] sm:$0xff]
        %v693 = vld [vmem:[%s188 + $0xe40] sm:$0xff]
        %v694 = vld [vmem:[%s188 + $0xe48] sm:$0xff]
        %v695 = vld [vmem:[%s188 + $0xe50] sm:$0xff]
        %v696 = vld [vmem:[%s188 + $0xe58] sm:$0xff]
        %v697 = vld [vmem:[%s188 + $0xe60] sm:$0xff]
        %v698 = vld [vmem:[%s188 + $0xe68] sm:$0xff]
        %v699 = vld [vmem:[%s188 + $0xe70] sm:$0xff]
        %v700 = vld [vmem:[%s188 + $0xe78] sm:$0xff]
        %v701 = vld [vmem:[%s188 + $0xe80] sm:$0xff]
        %v702 = vld [vmem:[%s188 + $0xe88] sm:$0xff]
        %v703 = vld [vmem:[%s188 + $0xe90] sm:$0xff]
        %v704 = vld [vmem:[%s188 + $0xe98] sm:$0xff]
        %v705 = vld [vmem:[%s188 + $0xea0] sm:$0xff]
        %v706 = vld [vmem:[%s188 + $0xea8] sm:$0xff]
        %v707 = vld [vmem:[%s188 + $0xeb0] sm:$0xff]
        %v708 = vld [vmem:[%s188 + $0xeb8] sm:$0xff]
        %v709 = vld [vmem:[%s188 + $0xec0] sm:$0xff]
        %v710 = vld [vmem:[%s188 + $0xec8] sm:$0xff]
        %v711 = vld [vmem:[%s188 + $0xed0] sm:$0xff]
        %v712 = vld [vmem:[%s188 + $0xed8] sm:$0xff]
        %v713 = vld [vmem:[%s188 + $0xee0] sm:$0xff]
        %v714 = vld [vmem:[%s188 + $0xee8] sm:$0xff]
        %v715 = vld [vmem:[%s188 + $0xef0] sm:$0xff]
        %v716 = vld [vmem:[%s188 + $0xef8] sm:$0xff]
        %v717 = vld [vmem:[%s188 + $0xf00] sm:$0xff]
        %v718 = vld [vmem:[%s188 + $0xf08] sm:$0xff]
        %v719 = vld [vmem:[%s188 + $0xf10] sm:$0xff]
        %v720 = vld [vmem:[%s188 + $0xf18] sm:$0xff]
        %v721 = vld [vmem:[%s188 + $0xf20] sm:$0xff]
        %v722 = vld [vmem:[%s188 + $0xf28] sm:$0xff]
        %v723 = vld [vmem:[%s188 + $0xf30] sm:$0xff]
        %v724 = vld [vmem:[%s188 + $0xf38] sm:$0xff]
        %v725 = vld [vmem:[%s188 + $0xf40] sm:$0xff]
        %v726 = vld [vmem:[%s188 + $0xf48] sm:$0xff]
        %v727 = vld [vmem:[%s188 + $0xf50] sm:$0xff]
        %v728 = vld [vmem:[%s188 + $0xf58] sm:$0xff]
        %v729 = vld [vmem:[%s188 + $0xf60] sm:$0xff]
        %v730 = vld [vmem:[%s188 + $0xf68] sm:$0xff]
        %v731 = vld [vmem:[%s188 + $0xf70] sm:$0xff]
        %v732 = vld [vmem:[%s188 + $0xf78] sm:$0xff]
        %v733 = vld [vmem:[%s188 + $0xf80] sm:$0xff]
        %v734 = vld [vmem:[%s188 + $0xf88] sm:$0xff]
        %v735 = vld [vmem:[%s188 + $0xf90] sm:$0xff]
        %v736 = vld [vmem:[%s188 + $0xf98] sm:$0xff]
        %v737 = vld [vmem:[%s188 + $0xfa0] sm:$0xff]
        %v738 = vld [vmem:[%s188 + $0xfa8] sm:$0xff]
        %v739 = vld [vmem:[%s188 + $0xfb0] sm:$0xff]
        %v740 = vld [vmem:[%s188 + $0xfb8] sm:$0xff]
        %v741 = vld [vmem:[%s188 + $0xfc0] sm:$0xff]
        %v742 = vld [vmem:[%s188 + $0xfc8] sm:$0xff]
        %v743 = vld [vmem:[%s188 + $0xfd0] sm:$0xff]
        %v744 = vld [vmem:[%s188 + $0xfd8] sm:$0xff]
        %v745 = vld [vmem:[%s188 + $0xfe0] sm:$0xff]
        %v746 = vld [vmem:[%s188 + $0xfe8] sm:$0xff]
        %v747 = vld [vmem:[%s188 + $0xff0] sm:$0xff]
        %v748 = vld [vmem:[%s188 + $0xff8] sm:$0xff]
        %v749 = vld [vmem:[%s188 + $0x1000] sm:$0xff]
        %v750 = vld [vmem:[%s188 + $0x1008] sm:$0xff]
        %v751 = vld [vmem:[%s188 + $0x1010] sm:$0xff]
        %v752 = vld [vmem:[%s188 + $0x1018] sm:$0xff]
        %v753 = vld [vmem:[%s188 + $0x1020] sm:$0xff]
        %v754 = vld [vmem:[%s188 + $0x1028] sm:$0xff]
        %v755 = vld [vmem:[%s188 + $0x1030] sm:$0xff]
        %v756 = vld [vmem:[%s188 + $0x1038] sm:$0xff]
        %v757 = vld [vmem:[%s188 + $0x1040] sm:$0xff]
        %v758 = vld [vmem:[%s188 + $0x1048] sm:$0xff]
        %v759 = vld [vmem:[%s188 + $0x1050] sm:$0xff]
        %v760 = vld [vmem:[%s188 + $0x1058] sm:$0xff]
        %v761 = vld [vmem:[%s188 + $0x1060] sm:$0xff]
        %v762 = vld [vmem:[%s188 + $0x1068] sm:$0xff]
        %v763 = vld [vmem:[%s188 + $0x1070] sm:$0xff]
        %v764 = vld [vmem:[%s188 + $0x1078] sm:$0xff]
        %v765 = vld [vmem:[%s188 + $0x1080] sm:$0xff]
        %v766 = vld [vmem:[%s188 + $0x1088] sm:$0xff]
        %v767 = vld [vmem:[%s188 + $0x1090] sm:$0xff]
        %v768 = vld [vmem:[%s188 + $0x1098] sm:$0xff]
        %v769 = vld [vmem:[%s188 + $0x10a0] sm:$0xff]
        %v770 = vld [vmem:[%s188 + $0x10a8] sm:$0xff]
        %v771 = vld [vmem:[%s188 + $0x10b0] sm:$0xff]
        %v772 = vld [vmem:[%s188 + $0x10b8] sm:$0xff]
        %v773 = vld [vmem:[%s188 + $0x10c0] sm:$0xff]
        %v774 = vld [vmem:[%s188 + $0x10c8] sm:$0xff]
        %v775 = vld [vmem:[%s188 + $0x10d0] sm:$0xff]
        %v776 = vld [vmem:[%s188 + $0x10d8] sm:$0xff]
        %v777 = vld [vmem:[%s188 + $0x10e0] sm:$0xff]
        %v778 = vld [vmem:[%s188 + $0x10e8] sm:$0xff]
        %v779 = vld [vmem:[%s188 + $0x10f0] sm:$0xff]
        %v780 = vld [vmem:[%s188 + $0x10f8] sm:$0xff]
        %v781 = vld [vmem:[%s188 + $0x1100] sm:$0xff]
        %v782 = vld [vmem:[%s188 + $0x1108] sm:$0xff]
        %v783 = vld [vmem:[%s188 + $0x1110] sm:$0xff]
        %v784 = vld [vmem:[%s188 + $0x1118] sm:$0xff]
        %v785 = vld [vmem:[%s188 + $0x1120] sm:$0xff]
        %v786 = vld [vmem:[%s188 + $0x1128] sm:$0xff]
        %v787 = vld [vmem:[%s188 + $0x1130] sm:$0xff]
        %v788 = vld [vmem:[%s188 + $0x1138] sm:$0xff]
        %v789 = vld [vmem:[%s188 + $0x1140] sm:$0xff]
        %v790 = vld [vmem:[%s188 + $0x1148] sm:$0xff]
        %v791 = vld [vmem:[%s188 + $0x1150] sm:$0xff]
        %v792 = vld [vmem:[%s188 + $0x1158] sm:$0xff]
        %v793 = vld [vmem:[%s188 + $0x1160] sm:$0xff]
        %v794 = vld [vmem:[%s188 + $0x1168] sm:$0xff]
        %v795 = vld [vmem:[%s188 + $0x1170] sm:$0xff]
        %v796 = vld [vmem:[%s188 + $0x1178] sm:$0xff]
        %v797 = vld [vmem:[%s188 + $0x1180] sm:$0xff]
        %v798 = vld [vmem:[%s188 + $0x1188] sm:$0xff]
        %v799 = vld [vmem:[%s188 + $0x1190] sm:$0xff]
        %v800 = vld [vmem:[%s188 + $0x1198] sm:$0xff]
        %v801 = vld [vmem:[%s188 + $0x11a0] sm:$0xff]
        %v802 = vld [vmem:[%s188 + $0x11a8] sm:$0xff]
        %v803 = vld [vmem:[%s188 + $0x11b0] sm:$0xff]
        %v804 = vld [vmem:[%s188 + $0x11b8] sm:$0xff]
        %v805 = vld [vmem:[%s188 + $0x11c0] sm:$0xff]
        %v806 = vld [vmem:[%s188 + $0x11c8] sm:$0xff]
        %v807 = vld [vmem:[%s188 + $0x11d0] sm:$0xff]
        %v808 = vld [vmem:[%s188 + $0x11d8] sm:$0xff]
        %v809 = vld [vmem:[%s188 + $0x11e0] sm:$0xff]
        %v810 = vld [vmem:[%s188 + $0x11e8] sm:$0xff]
        %v811 = vld [vmem:[%s188 + $0x11f0] sm:$0xff]
        %v812 = vld [vmem:[%s188 + $0x11f8] sm:$0xff]
        %v813 = vld [vmem:[%s198] sm:$0x3f]
        %v815 = vperm.slane %v813, 0
        %v816 = vperm.slane %v813, 1
        %v817 = vperm.slane %v813, 2
        %v818 = vperm.slane %v813, 3
        %v819 = vperm.slane %v813, 4
        %v820 = vperm.slane %v813, 5
        %829 = vst [vmem:[#allocation1] ss:$4 sm:$0xff] %v235
        %s830 = scalar_lea.vmem [#allocation1], 32
        %831 = vst [vmem:[%s830] ss:$4 sm:$0xff] %v236
        %v832 = vld.sshfl [vmem:[#allocation1] sm:$0xff pattern:$0x73625140]
        %v833 = vld.sshfl [vmem:[#allocation1 + $0x8] sm:$0xff pattern:$0x73625140]
        %v834 = vld.sshfl [vmem:[#allocation1 + $0x10] sm:$0xff pattern:$0x73625140]
        %v835 = vld.sshfl [vmem:[#allocation1 + $0x18] sm:$0xff pattern:$0x73625140]
        %v836 = vld.sshfl [vmem:[#allocation1 + $0x20] sm:$0xff pattern:$0x73625140]
        %v837 = vld.sshfl [vmem:[#allocation1 + $0x28] sm:$0xff pattern:$0x73625140]
        %844 = vmatpush.msra.mxu0 %v327
        %845 = vmatpush.msra.mxu0 %v321
        %846 = vmatpush.msra.mxu0 %v315
        %847 = vmatpush.msra.mxu0 %v309
        %848 = vmatpush.msra.mxu0 %v303
        %849 = vmatpush.msra.mxu0 %v297
        %850 = vmatpush.msra.mxu0 %v291
        %851 = vmatpush.msra.mxu0 %v285
        %852 = vmatpush.msra.mxu0 %v279
        %853 = vmatpush.msra.mxu0 %v273
        %854 = vmatpush.msra.mxu0 %v267
        %855 = vmatpush.msra.mxu0 %v261
        %856 = vmatpush.msra.mxu0 %v255
        %857 = vmatpush.msra.mxu0 %v249
        %858 = vmatpush.msra.mxu0 %v243
        %859 = vmatpush.msra.mxu0 %v237
        %860 = vmatmul.f32.gmra.mxu0 %v832
        %v861 = vpop.f32.mrf.mxu0
        %v862 = vadd.f32 %v815, %v861
        %863 = vdwg.mxu0
        %864 = vmatpush.msra.mxu0 %v423
        %865 = vmatpush.msra.mxu0 %v417
        %866 = vmatpush.msra.mxu0 %v411
        %867 = vmatpush.msra.mxu0 %v405
        %868 = vmatpush.msra.mxu0 %v399
        %869 = vmatpush.msra.mxu0 %v393
        %870 = vmatpush.msra.mxu0 %v387
        %871 = vmatpush.msra.mxu0 %v381
        %872 = vmatpush.msra.mxu0 %v375
        %873 = vmatpush.msra.mxu0 %v369
        %874 = vmatpush.msra.mxu0 %v363
        %875 = vmatpush.msra.mxu0 %v357
        %876 = vmatpush.msra.mxu0 %v351
        %877 = vmatpush.msra.mxu0 %v345
        %878 = vmatpush.msra.mxu0 %v339
        %879 = vmatpush.msra.mxu0 %v333
        %880 = vmatmul.f32.gmra.mxu0 %v833
        %v881 = vpop.f32.mrf.mxu0
        %v882 = vadd.f32 %v862, %v881
        %883 = vdwg.mxu0
        %884 = vmatpush.msra.mxu0 %v519
        %885 = vmatpush.msra.mxu0 %v513
        %886 = vmatpush.msra.mxu0 %v507
        %887 = vmatpush.msra.mxu0 %v501
        %888 = vmatpush.msra.mxu0 %v495
        %889 = vmatpush.msra.mxu0 %v489
        %890 = vmatpush.msra.mxu0 %v483
        %891 = vmatpush.msra.mxu0 %v477
        %892 = vmatpush.msra.mxu0 %v471
        %893 = vmatpush.msra.mxu0 %v465
        %894 = vmatpush.msra.mxu0 %v459
        %895 = vmatpush.msra.mxu0 %v453
        %896 = vmatpush.msra.mxu0 %v447
        %897 = vmatpush.msra.mxu0 %v441
        %898 = vmatpush.msra.mxu0 %v435
        %899 = vmatpush.msra.mxu0 %v429
        %900 = vmatmul.f32.gmra.mxu0 %v834
        %v901 = vpop.f32.mrf.mxu0
        %v902 = vadd.f32 %v882, %v901
        %903 = vdwg.mxu0
        %904 = vmatpush.msra.mxu0 %v615
        %905 = vmatpush.msra.mxu0 %v609
        %906 = vmatpush.msra.mxu0 %v603
        %907 = vmatpush.msra.mxu0 %v597
        %908 = vmatpush.msra.mxu0 %v591
        %909 = vmatpush.msra.mxu0 %v585
        %910 = vmatpush.msra.mxu0 %v579
        %911 = vmatpush.msra.mxu0 %v573
        %912 = vmatpush.msra.mxu0 %v567
        %913 = vmatpush.msra.mxu0 %v561
        %914 = vmatpush.msra.mxu0 %v555
        %915 = vmatpush.msra.mxu0 %v549
        %916 = vmatpush.msra.mxu0 %v543
        %917 = vmatpush.msra.mxu0 %v537
        %918 = vmatpush.msra.mxu0 %v531
        %919 = vmatpush.msra.mxu0 %v525
        %920 = vmatmul.f32.gmra.mxu0 %v835
        %v921 = vpop.f32.mrf.mxu0
        %v922 = vadd.f32 %v902, %v921
        %923 = vdwg.mxu0
        %924 = vmatpush.msra.mxu0 %v711
        %925 = vmatpush.msra.mxu0 %v705
        %926 = vmatpush.msra.mxu0 %v699
        %927 = vmatpush.msra.mxu0 %v693
        %928 = vmatpush.msra.mxu0 %v687
        %929 = vmatpush.msra.mxu0 %v681
        %930 = vmatpush.msra.mxu0 %v675
        %931 = vmatpush.msra.mxu0 %v669
        %932 = vmatpush.msra.mxu0 %v663
        %933 = vmatpush.msra.mxu0 %v657
        %934 = vmatpush.msra.mxu0 %v651
        %935 = vmatpush.msra.mxu0 %v645
        %936 = vmatpush.msra.mxu0 %v639
        %937 = vmatpush.msra.mxu0 %v633
        %938 = vmatpush.msra.mxu0 %v627
        %939 = vmatpush.msra.mxu0 %v621
        %940 = vmatmul.f32.gmra.mxu0 %v836
        %v941 = vpop.f32.mrf.mxu0
        %v942 = vadd.f32 %v922, %v941
        %943 = vdwg.mxu0
        %944 = vmatpush.msra.mxu0 %v807
        %945 = vmatpush.msra.mxu0 %v801
        %946 = vmatpush.msra.mxu0 %v795
        %947 = vmatpush.msra.mxu0 %v789
        %948 = vmatpush.msra.mxu0 %v783
        %949 = vmatpush.msra.mxu0 %v777
        %950 = vmatpush.msra.mxu0 %v771
        %951 = vmatpush.msra.mxu0 %v765
        %952 = vmatpush.msra.mxu0 %v759
        %953 = vmatpush.msra.mxu0 %v753
        %954 = vmatpush.msra.mxu0 %v747
        %955 = vmatpush.msra.mxu0 %v741
        %956 = vmatpush.msra.mxu0 %v735
        %957 = vmatpush.msra.mxu0 %v729
        %958 = vmatpush.msra.mxu0 %v723
        %959 = vmatpush.msra.mxu0 %v717
        %960 = vmatmul.f32.gmra.mxu0 %v837
        %v961 = vpop.f32.mrf.mxu0
        %v962 = vadd.f32 %v942, %v961
        %963 = vdwg.mxu0
        %964 = vmatpush.msra.mxu0 %v328
        %965 = vmatpush.msra.mxu0 %v322
        %966 = vmatpush.msra.mxu0 %v316
        %967 = vmatpush.msra.mxu0 %v310
        %968 = vmatpush.msra.mxu0 %v304
        %969 = vmatpush.msra.mxu0 %v298
        %970 = vmatpush.msra.mxu0 %v292
        %971 = vmatpush.msra.mxu0 %v286
        %972 = vmatpush.msra.mxu0 %v280
        %973 = vmatpush.msra.mxu0 %v274
        %974 = vmatpush.msra.mxu0 %v268
        %975 = vmatpush.msra.mxu0 %v262
        %976 = vmatpush.msra.mxu0 %v256
        %977 = vmatpush.msra.mxu0 %v250
        %978 = vmatpush.msra.mxu0 %v244
        %979 = vmatpush.msra.mxu0 %v238
        %980 = vmatmul.f32.gmra.mxu0 %v832
        %v981 = vpop.f32.mrf.mxu0
        %v982 = vadd.f32 %v816, %v981
        %983 = vdwg.mxu0
        %984 = vmatpush.msra.mxu0 %v424
        %985 = vmatpush.msra.mxu0 %v418
        %986 = vmatpush.msra.mxu0 %v412
        %987 = vmatpush.msra.mxu0 %v406
        %988 = vmatpush.msra.mxu0 %v400
        %989 = vmatpush.msra.mxu0 %v394
        %990 = vmatpush.msra.mxu0 %v388
        %991 = vmatpush.msra.mxu0 %v382
        %992 = vmatpush.msra.mxu0 %v376
        %993 = vmatpush.msra.mxu0 %v370
        %994 = vmatpush.msra.mxu0 %v364
        %995 = vmatpush.msra.mxu0 %v358
        %996 = vmatpush.msra.mxu0 %v352
        %997 = vmatpush.msra.mxu0 %v346
        %998 = vmatpush.msra.mxu0 %v340
        %999 = vmatpush.msra.mxu0 %v334
        %1000 = vmatmul.f32.gmra.mxu0 %v833
        %v1001 = vpop.f32.mrf.mxu0
        %v1002 = vadd.f32 %v982, %v1001
        %1003 = vdwg.mxu0
        %1004 = vmatpush.msra.mxu0 %v520
        %1005 = vmatpush.msra.mxu0 %v514
        %1006 = vmatpush.msra.mxu0 %v508
        %1007 = vmatpush.msra.mxu0 %v502
        %1008 = vmatpush.msra.mxu0 %v496
        %1009 = vmatpush.msra.mxu0 %v490
        %1010 = vmatpush.msra.mxu0 %v484
        %1011 = vmatpush.msra.mxu0 %v478
        %1012 = vmatpush.msra.mxu0 %v472
        %1013 = vmatpush.msra.mxu0 %v466
        %1014 = vmatpush.msra.mxu0 %v460
        %1015 = vmatpush.msra.mxu0 %v454
        %1016 = vmatpush.msra.mxu0 %v448
        %1017 = vmatpush.msra.mxu0 %v442
        %1018 = vmatpush.msra.mxu0 %v436
        %1019 = vmatpush.msra.mxu0 %v430
        %1020 = vmatmul.f32.gmra.mxu0 %v834
        %v1021 = vpop.f32.mrf.mxu0
        %v1022 = vadd.f32 %v1002, %v1021
        %1023 = vdwg.mxu0
        %1024 = vmatpush.msra.mxu0 %v616
        %1025 = vmatpush.msra.mxu0 %v610
        %1026 = vmatpush.msra.mxu0 %v604
        %1027 = vmatpush.msra.mxu0 %v598
        %1028 = vmatpush.msra.mxu0 %v592
        %1029 = vmatpush.msra.mxu0 %v586
        %1030 = vmatpush.msra.mxu0 %v580
        %1031 = vmatpush.msra.mxu0 %v574
        %1032 = vmatpush.msra.mxu0 %v568
        %1033 = vmatpush.msra.mxu0 %v562
        %1034 = vmatpush.msra.mxu0 %v556
        %1035 = vmatpush.msra.mxu0 %v550
        %1036 = vmatpush.msra.mxu0 %v544
        %1037 = vmatpush.msra.mxu0 %v538
        %1038 = vmatpush.msra.mxu0 %v532
        %1039 = vmatpush.msra.mxu0 %v526
        %1040 = vmatmul.f32.gmra.mxu0 %v835
        %v1041 = vpop.f32.mrf.mxu0
        %v1042 = vadd.f32 %v1022, %v1041
        %1043 = vdwg.mxu0
        %1044 = vmatpush.msra.mxu0 %v712
        %1045 = vmatpush.msra.mxu0 %v706
        %1046 = vmatpush.msra.mxu0 %v700
        %1047 = vmatpush.msra.mxu0 %v694
        %1048 = vmatpush.msra.mxu0 %v688
        %1049 = vmatpush.msra.mxu0 %v682
        %1050 = vmatpush.msra.mxu0 %v676
        %1051 = vmatpush.msra.mxu0 %v670
        %1052 = vmatpush.msra.mxu0 %v664
        %1053 = vmatpush.msra.mxu0 %v658
        %1054 = vmatpush.msra.mxu0 %v652
        %1055 = vmatpush.msra.mxu0 %v646
        %1056 = vmatpush.msra.mxu0 %v640
        %1057 = vmatpush.msra.mxu0 %v634
        %1058 = vmatpush.msra.mxu0 %v628
        %1059 = vmatpush.msra.mxu0 %v622
        %1060 = vmatmul.f32.gmra.mxu0 %v836
        %v1061 = vpop.f32.mrf.mxu0
        %v1062 = vadd.f32 %v1042, %v1061
        %1063 = vdwg.mxu0
        %1064 = vmatpush.msra.mxu0 %v808
        %1065 = vmatpush.msra.mxu0 %v802
        %1066 = vmatpush.msra.mxu0 %v796
        %1067 = vmatpush.msra.mxu0 %v790
        %1068 = vmatpush.msra.mxu0 %v784
        %1069 = vmatpush.msra.mxu0 %v778
        %1070 = vmatpush.msra.mxu0 %v772
        %1071 = vmatpush.msra.mxu0 %v766
        %1072 = vmatpush.msra.mxu0 %v760
        %1073 = vmatpush.msra.mxu0 %v754
        %1074 = vmatpush.msra.mxu0 %v748
        %1075 = vmatpush.msra.mxu0 %v742
        %1076 = vmatpush.msra.mxu0 %v736
        %1077 = vmatpush.msra.mxu0 %v730
        %1078 = vmatpush.msra.mxu0 %v724
        %1079 = vmatpush.msra.mxu0 %v718
        %1080 = vmatmul.f32.gmra.mxu0 %v837
        %v1081 = vpop.f32.mrf.mxu0
        %v1082 = vadd.f32 %v1062, %v1081
        %1083 = vdwg.mxu0
        %1084 = vmatpush.msra.mxu0 %v329
        %1085 = vmatpush.msra.mxu0 %v323
        %1086 = vmatpush.msra.mxu0 %v317
        %1087 = vmatpush.msra.mxu0 %v311
        %1088 = vmatpush.msra.mxu0 %v305
        %1089 = vmatpush.msra.mxu0 %v299
        %1090 = vmatpush.msra.mxu0 %v293
        %1091 = vmatpush.msra.mxu0 %v287
        %1092 = vmatpush.msra.mxu0 %v281
        %1093 = vmatpush.msra.mxu0 %v275
        %1094 = vmatpush.msra.mxu0 %v269
        %1095 = vmatpush.msra.mxu0 %v263
        %1096 = vmatpush.msra.mxu0 %v257
        %1097 = vmatpush.msra.mxu0 %v251
        %1098 = vmatpush.msra.mxu0 %v245
        %1099 = vmatpush.msra.mxu0 %v239
        %1100 = vmatmul.f32.gmra.mxu0 %v832
        %v1101 = vpop.f32.mrf.mxu0
        %v1102 = vadd.f32 %v817, %v1101
        %1103 = vdwg.mxu0
        %1104 = vmatpush.msra.mxu0 %v425
        %1105 = vmatpush.msra.mxu0 %v419
        %1106 = vmatpush.msra.mxu0 %v413
        %1107 = vmatpush.msra.mxu0 %v407
        %1108 = vmatpush.msra.mxu0 %v401
        %1109 = vmatpush.msra.mxu0 %v395
        %1110 = vmatpush.msra.mxu0 %v389
        %1111 = vmatpush.msra.mxu0 %v383
        %1112 = vmatpush.msra.mxu0 %v377
        %1113 = vmatpush.msra.mxu0 %v371
        %1114 = vmatpush.msra.mxu0 %v365
        %1115 = vmatpush.msra.mxu0 %v359
        %1116 = vmatpush.msra.mxu0 %v353
        %1117 = vmatpush.msra.mxu0 %v347
        %1118 = vmatpush.msra.mxu0 %v341
        %1119 = vmatpush.msra.mxu0 %v335
        %1120 = vmatmul.f32.gmra.mxu0 %v833
        %v1121 = vpop.f32.mrf.mxu0
        %v1122 = vadd.f32 %v1102, %v1121
        %1123 = vdwg.mxu0
        %1124 = vmatpush.msra.mxu0 %v521
        %1125 = vmatpush.msra.mxu0 %v515
        %1126 = vmatpush.msra.mxu0 %v509
        %1127 = vmatpush.msra.mxu0 %v503
        %1128 = vmatpush.msra.mxu0 %v497
        %1129 = vmatpush.msra.mxu0 %v491
        %1130 = vmatpush.msra.mxu0 %v485
        %1131 = vmatpush.msra.mxu0 %v479
        %1132 = vmatpush.msra.mxu0 %v473
        %1133 = vmatpush.msra.mxu0 %v467
        %1134 = vmatpush.msra.mxu0 %v461
        %1135 = vmatpush.msra.mxu0 %v455
        %1136 = vmatpush.msra.mxu0 %v449
        %1137 = vmatpush.msra.mxu0 %v443
        %1138 = vmatpush.msra.mxu0 %v437
        %1139 = vmatpush.msra.mxu0 %v431
        %1140 = vmatmul.f32.gmra.mxu0 %v834
        %v1141 = vpop.f32.mrf.mxu0
        %v1142 = vadd.f32 %v1122, %v1141
        %1143 = vdwg.mxu0
        %1144 = vmatpush.msra.mxu0 %v617
        %1145 = vmatpush.msra.mxu0 %v611
        %1146 = vmatpush.msra.mxu0 %v605
        %1147 = vmatpush.msra.mxu0 %v599
        %1148 = vmatpush.msra.mxu0 %v593
        %1149 = vmatpush.msra.mxu0 %v587
        %1150 = vmatpush.msra.mxu0 %v581
        %1151 = vmatpush.msra.mxu0 %v575
        %1152 = vmatpush.msra.mxu0 %v569
        %1153 = vmatpush.msra.mxu0 %v563
        %1154 = vmatpush.msra.mxu0 %v557
        %1155 = vmatpush.msra.mxu0 %v551
        %1156 = vmatpush.msra.mxu0 %v545
        %1157 = vmatpush.msra.mxu0 %v539
        %1158 = vmatpush.msra.mxu0 %v533
        %1159 = vmatpush.msra.mxu0 %v527
        %1160 = vmatmul.f32.gmra.mxu0 %v835
        %v1161 = vpop.f32.mrf.mxu0
        %v1162 = vadd.f32 %v1142, %v1161
        %1163 = vdwg.mxu0
        %1164 = vmatpush.msra.mxu0 %v713
        %1165 = vmatpush.msra.mxu0 %v707
        %1166 = vmatpush.msra.mxu0 %v701
        %1167 = vmatpush.msra.mxu0 %v695
        %1168 = vmatpush.msra.mxu0 %v689
        %1169 = vmatpush.msra.mxu0 %v683
        %1170 = vmatpush.msra.mxu0 %v677
        %1171 = vmatpush.msra.mxu0 %v671
        %1172 = vmatpush.msra.mxu0 %v665
        %1173 = vmatpush.msra.mxu0 %v659
        %1174 = vmatpush.msra.mxu0 %v653
        %1175 = vmatpush.msra.mxu0 %v647
        %1176 = vmatpush.msra.mxu0 %v641
        %1177 = vmatpush.msra.mxu0 %v635
        %1178 = vmatpush.msra.mxu0 %v629
        %1179 = vmatpush.msra.mxu0 %v623
        %1180 = vmatmul.f32.gmra.mxu0 %v836
        %v1181 = vpop.f32.mrf.mxu0
        %v1182 = vadd.f32 %v1162, %v1181
        %1183 = vdwg.mxu0
        %1184 = vmatpush.msra.mxu0 %v809
        %1185 = vmatpush.msra.mxu0 %v803
        %1186 = vmatpush.msra.mxu0 %v797
        %1187 = vmatpush.msra.mxu0 %v791
        %1188 = vmatpush.msra.mxu0 %v785
        %1189 = vmatpush.msra.mxu0 %v779
        %1190 = vmatpush.msra.mxu0 %v773
        %1191 = vmatpush.msra.mxu0 %v767
        %1192 = vmatpush.msra.mxu0 %v761
        %1193 = vmatpush.msra.mxu0 %v755
        %1194 = vmatpush.msra.mxu0 %v749
        %1195 = vmatpush.msra.mxu0 %v743
        %1196 = vmatpush.msra.mxu0 %v737
        %1197 = vmatpush.msra.mxu0 %v731
        %1198 = vmatpush.msra.mxu0 %v725
        %1199 = vmatpush.msra.mxu0 %v719
        %1200 = vmatmul.f32.gmra.mxu0 %v837
        %v1201 = vpop.f32.mrf.mxu0
        %v1202 = vadd.f32 %v1182, %v1201
        %1203 = vdwg.mxu0
        %1204 = vmatpush.msra.mxu0 %v330
        %1205 = vmatpush.msra.mxu0 %v324
        %1206 = vmatpush.msra.mxu0 %v318
        %1207 = vmatpush.msra.mxu0 %v312
        %1208 = vmatpush.msra.mxu0 %v306
        %1209 = vmatpush.msra.mxu0 %v300
        %1210 = vmatpush.msra.mxu0 %v294
        %1211 = vmatpush.msra.mxu0 %v288
        %1212 = vmatpush.msra.mxu0 %v282
        %1213 = vmatpush.msra.mxu0 %v276
        %1214 = vmatpush.msra.mxu0 %v270
        %1215 = vmatpush.msra.mxu0 %v264
        %1216 = vmatpush.msra.mxu0 %v258
        %1217 = vmatpush.msra.mxu0 %v252
        %1218 = vmatpush.msra.mxu0 %v246
        %1219 = vmatpush.msra.mxu0 %v240
        %1220 = vmatmul.f32.gmra.mxu0 %v832
        %v1221 = vpop.f32.mrf.mxu0
        %v1222 = vadd.f32 %v818, %v1221
        %1223 = vdwg.mxu0
        %1224 = vmatpush.msra.mxu0 %v426
        %1225 = vmatpush.msra.mxu0 %v420
        %1226 = vmatpush.msra.mxu0 %v414
        %1227 = vmatpush.msra.mxu0 %v408
        %1228 = vmatpush.msra.mxu0 %v402
        %1229 = vmatpush.msra.mxu0 %v396
        %1230 = vmatpush.msra.mxu0 %v390
        %1231 = vmatpush.msra.mxu0 %v384
        %1232 = vmatpush.msra.mxu0 %v378
        %1233 = vmatpush.msra.mxu0 %v372
        %1234 = vmatpush.msra.mxu0 %v366
        %1235 = vmatpush.msra.mxu0 %v360
        %1236 = vmatpush.msra.mxu0 %v354
        %1237 = vmatpush.msra.mxu0 %v348
        %1238 = vmatpush.msra.mxu0 %v342
        %1239 = vmatpush.msra.mxu0 %v336
        %1240 = vmatmul.f32.gmra.mxu0 %v833
        %v1241 = vpop.f32.mrf.mxu0
        %v1242 = vadd.f32 %v1222, %v1241
        %1243 = vdwg.mxu0
        %1244 = vmatpush.msra.mxu0 %v522
        %1245 = vmatpush.msra.mxu0 %v516
        %1246 = vmatpush.msra.mxu0 %v510
        %1247 = vmatpush.msra.mxu0 %v504
        %1248 = vmatpush.msra.mxu0 %v498
        %1249 = vmatpush.msra.mxu0 %v492
        %1250 = vmatpush.msra.mxu0 %v486
        %1251 = vmatpush.msra.mxu0 %v480
        %1252 = vmatpush.msra.mxu0 %v474
        %1253 = vmatpush.msra.mxu0 %v468
        %1254 = vmatpush.msra.mxu0 %v462
        %1255 = vmatpush.msra.mxu0 %v456
        %1256 = vmatpush.msra.mxu0 %v450
        %1257 = vmatpush.msra.mxu0 %v444
        %1258 = vmatpush.msra.mxu0 %v438
        %1259 = vmatpush.msra.mxu0 %v432
        %1260 = vmatmul.f32.gmra.mxu0 %v834
        %v1261 = vpop.f32.mrf.mxu0
        %v1262 = vadd.f32 %v1242, %v1261
        %1263 = vdwg.mxu0
        %1264 = vmatpush.msra.mxu0 %v618
        %1265 = vmatpush.msra.mxu0 %v612
        %1266 = vmatpush.msra.mxu0 %v606
        %1267 = vmatpush.msra.mxu0 %v600
        %1268 = vmatpush.msra.mxu0 %v594
        %1269 = vmatpush.msra.mxu0 %v588
        %1270 = vmatpush.msra.mxu0 %v582
        %1271 = vmatpush.msra.mxu0 %v576
        %1272 = vmatpush.msra.mxu0 %v570
        %1273 = vmatpush.msra.mxu0 %v564
        %1274 = vmatpush.msra.mxu0 %v558
        %1275 = vmatpush.msra.mxu0 %v552
        %1276 = vmatpush.msra.mxu0 %v546
        %1277 = vmatpush.msra.mxu0 %v540
        %1278 = vmatpush.msra.mxu0 %v534
        %1279 = vmatpush.msra.mxu0 %v528
        %1280 = vmatmul.f32.gmra.mxu0 %v835
        %v1281 = vpop.f32.mrf.mxu0
        %v1282 = vadd.f32 %v1262, %v1281
        %1283 = vdwg.mxu0
        %1284 = vmatpush.msra.mxu0 %v714
        %1285 = vmatpush.msra.mxu0 %v708
        %1286 = vmatpush.msra.mxu0 %v702
        %1287 = vmatpush.msra.mxu0 %v696
        %1288 = vmatpush.msra.mxu0 %v690
        %1289 = vmatpush.msra.mxu0 %v684
        %1290 = vmatpush.msra.mxu0 %v678
        %1291 = vmatpush.msra.mxu0 %v672
        %1292 = vmatpush.msra.mxu0 %v666
        %1293 = vmatpush.msra.mxu0 %v660
        %1294 = vmatpush.msra.mxu0 %v654
        %1295 = vmatpush.msra.mxu0 %v648
        %1296 = vmatpush.msra.mxu0 %v642
        %1297 = vmatpush.msra.mxu0 %v636
        %1298 = vmatpush.msra.mxu0 %v630
        %1299 = vmatpush.msra.mxu0 %v624
        %1300 = vmatmul.f32.gmra.mxu0 %v836
        %v1301 = vpop.f32.mrf.mxu0
        %v1302 = vadd.f32 %v1282, %v1301
        %1303 = vdwg.mxu0
        %1304 = vmatpush.msra.mxu0 %v810
        %1305 = vmatpush.msra.mxu0 %v804
        %1306 = vmatpush.msra.mxu0 %v798
        %1307 = vmatpush.msra.mxu0 %v792
        %1308 = vmatpush.msra.mxu0 %v786
        %1309 = vmatpush.msra.mxu0 %v780
        %1310 = vmatpush.msra.mxu0 %v774
        %1311 = vmatpush.msra.mxu0 %v768
        %1312 = vmatpush.msra.mxu0 %v762
        %1313 = vmatpush.msra.mxu0 %v756
        %1314 = vmatpush.msra.mxu0 %v750
        %1315 = vmatpush.msra.mxu0 %v744
        %1316 = vmatpush.msra.mxu0 %v738
        %1317 = vmatpush.msra.mxu0 %v732
        %1318 = vmatpush.msra.mxu0 %v726
        %1319 = vmatpush.msra.mxu0 %v720
        %1320 = vmatmul.f32.gmra.mxu0 %v837
        %v1321 = vpop.f32.mrf.mxu0
        %v1322 = vadd.f32 %v1302, %v1321
        %1323 = vdwg.mxu0
        %1324 = vmatpush.msra.mxu0 %v331
        %1325 = vmatpush.msra.mxu0 %v325
        %1326 = vmatpush.msra.mxu0 %v319
        %1327 = vmatpush.msra.mxu0 %v313
        %1328 = vmatpush.msra.mxu0 %v307
        %1329 = vmatpush.msra.mxu0 %v301
        %1330 = vmatpush.msra.mxu0 %v295
        %1331 = vmatpush.msra.mxu0 %v289
        %1332 = vmatpush.msra.mxu0 %v283
        %1333 = vmatpush.msra.mxu0 %v277
        %1334 = vmatpush.msra.mxu0 %v271
        %1335 = vmatpush.msra.mxu0 %v265
        %1336 = vmatpush.msra.mxu0 %v259
        %1337 = vmatpush.msra.mxu0 %v253
        %1338 = vmatpush.msra.mxu0 %v247
        %1339 = vmatpush.msra.mxu0 %v241
        %1340 = vmatmul.f32.gmra.mxu0 %v832
        %v1341 = vpop.f32.mrf.mxu0
        %v1342 = vadd.f32 %v819, %v1341
        %1343 = vdwg.mxu0
        %1344 = vmatpush.msra.mxu0 %v427
        %1345 = vmatpush.msra.mxu0 %v421
        %1346 = vmatpush.msra.mxu0 %v415
        %1347 = vmatpush.msra.mxu0 %v409
        %1348 = vmatpush.msra.mxu0 %v403
        %1349 = vmatpush.msra.mxu0 %v397
        %1350 = vmatpush.msra.mxu0 %v391
        %1351 = vmatpush.msra.mxu0 %v385
        %1352 = vmatpush.msra.mxu0 %v379
        %1353 = vmatpush.msra.mxu0 %v373
        %1354 = vmatpush.msra.mxu0 %v367
        %1355 = vmatpush.msra.mxu0 %v361
        %1356 = vmatpush.msra.mxu0 %v355
        %1357 = vmatpush.msra.mxu0 %v349
        %1358 = vmatpush.msra.mxu0 %v343
        %1359 = vmatpush.msra.mxu0 %v337
        %1360 = vmatmul.f32.gmra.mxu0 %v833
        %v1361 = vpop.f32.mrf.mxu0
        %v1362 = vadd.f32 %v1342, %v1361
        %1363 = vdwg.mxu0
        %1364 = vmatpush.msra.mxu0 %v523
        %1365 = vmatpush.msra.mxu0 %v517
        %1366 = vmatpush.msra.mxu0 %v511
        %1367 = vmatpush.msra.mxu0 %v505
        %1368 = vmatpush.msra.mxu0 %v499
        %1369 = vmatpush.msra.mxu0 %v493
        %1370 = vmatpush.msra.mxu0 %v487
        %1371 = vmatpush.msra.mxu0 %v481
        %1372 = vmatpush.msra.mxu0 %v475
        %1373 = vmatpush.msra.mxu0 %v469
        %1374 = vmatpush.msra.mxu0 %v463
        %1375 = vmatpush.msra.mxu0 %v457
        %1376 = vmatpush.msra.mxu0 %v451
        %1377 = vmatpush.msra.mxu0 %v445
        %1378 = vmatpush.msra.mxu0 %v439
        %1379 = vmatpush.msra.mxu0 %v433
        %1380 = vmatmul.f32.gmra.mxu0 %v834
        %v1381 = vpop.f32.mrf.mxu0
        %v1382 = vadd.f32 %v1362, %v1381
        %1383 = vdwg.mxu0
        %1384 = vmatpush.msra.mxu0 %v619
        %1385 = vmatpush.msra.mxu0 %v613
        %1386 = vmatpush.msra.mxu0 %v607
        %1387 = vmatpush.msra.mxu0 %v601
        %1388 = vmatpush.msra.mxu0 %v595
        %1389 = vmatpush.msra.mxu0 %v589
        %1390 = vmatpush.msra.mxu0 %v583
        %1391 = vmatpush.msra.mxu0 %v577
        %1392 = vmatpush.msra.mxu0 %v571
        %1393 = vmatpush.msra.mxu0 %v565
        %1394 = vmatpush.msra.mxu0 %v559
        %1395 = vmatpush.msra.mxu0 %v553
        %1396 = vmatpush.msra.mxu0 %v547
        %1397 = vmatpush.msra.mxu0 %v541
        %1398 = vmatpush.msra.mxu0 %v535
        %1399 = vmatpush.msra.mxu0 %v529
        %1400 = vmatmul.f32.gmra.mxu0 %v835
        %v1401 = vpop.f32.mrf.mxu0
        %v1402 = vadd.f32 %v1382, %v1401
        %1403 = vdwg.mxu0
        %1404 = vmatpush.msra.mxu0 %v715
        %1405 = vmatpush.msra.mxu0 %v709
        %1406 = vmatpush.msra.mxu0 %v703
        %1407 = vmatpush.msra.mxu0 %v697
        %1408 = vmatpush.msra.mxu0 %v691
        %1409 = vmatpush.msra.mxu0 %v685
        %1410 = vmatpush.msra.mxu0 %v679
        %1411 = vmatpush.msra.mxu0 %v673
        %1412 = vmatpush.msra.mxu0 %v667
        %1413 = vmatpush.msra.mxu0 %v661
        %1414 = vmatpush.msra.mxu0 %v655
        %1415 = vmatpush.msra.mxu0 %v649
        %1416 = vmatpush.msra.mxu0 %v643
        %1417 = vmatpush.msra.mxu0 %v637
        %1418 = vmatpush.msra.mxu0 %v631
        %1419 = vmatpush.msra.mxu0 %v625
        %1420 = vmatmul.f32.gmra.mxu0 %v836
        %v1421 = vpop.f32.mrf.mxu0
        %v1422 = vadd.f32 %v1402, %v1421
        %1423 = vdwg.mxu0
        %1424 = vmatpush.msra.mxu0 %v811
        %1425 = vmatpush.msra.mxu0 %v805
        %1426 = vmatpush.msra.mxu0 %v799
        %1427 = vmatpush.msra.mxu0 %v793
        %1428 = vmatpush.msra.mxu0 %v787
        %1429 = vmatpush.msra.mxu0 %v781
        %1430 = vmatpush.msra.mxu0 %v775
        %1431 = vmatpush.msra.mxu0 %v769
        %1432 = vmatpush.msra.mxu0 %v763
        %1433 = vmatpush.msra.mxu0 %v757
        %1434 = vmatpush.msra.mxu0 %v751
        %1435 = vmatpush.msra.mxu0 %v745
        %1436 = vmatpush.msra.mxu0 %v739
        %1437 = vmatpush.msra.mxu0 %v733
        %1438 = vmatpush.msra.mxu0 %v727
        %1439 = vmatpush.msra.mxu0 %v721
        %1440 = vmatmul.f32.gmra.mxu0 %v837
        %v1441 = vpop.f32.mrf.mxu0
        %v1442 = vadd.f32 %v1422, %v1441
        %1443 = vdwg.mxu0
        %1444 = vmatpush.msra.mxu0 %v332
        %1445 = vmatpush.msra.mxu0 %v326
        %1446 = vmatpush.msra.mxu0 %v320
        %1447 = vmatpush.msra.mxu0 %v314
        %1448 = vmatpush.msra.mxu0 %v308
        %1449 = vmatpush.msra.mxu0 %v302
        %1450 = vmatpush.msra.mxu0 %v296
        %1451 = vmatpush.msra.mxu0 %v290
        %1452 = vmatpush.msra.mxu0 %v284
        %1453 = vmatpush.msra.mxu0 %v278
        %1454 = vmatpush.msra.mxu0 %v272
        %1455 = vmatpush.msra.mxu0 %v266
        %1456 = vmatpush.msra.mxu0 %v260
        %1457 = vmatpush.msra.mxu0 %v254
        %1458 = vmatpush.msra.mxu0 %v248
        %1459 = vmatpush.msra.mxu0 %v242
        %1460 = vmatmul.f32.gmra.mxu0 %v832
        %v1461 = vpop.f32.mrf.mxu0
        %v1462 = vadd.f32 %v820, %v1461
        %1463 = vdwg.mxu0
        %1464 = vmatpush.msra.mxu0 %v428
        %1465 = vmatpush.msra.mxu0 %v422
        %1466 = vmatpush.msra.mxu0 %v416
        %1467 = vmatpush.msra.mxu0 %v410
        %1468 = vmatpush.msra.mxu0 %v404
        %1469 = vmatpush.msra.mxu0 %v398
        %1470 = vmatpush.msra.mxu0 %v392
        %1471 = vmatpush.msra.mxu0 %v386
        %1472 = vmatpush.msra.mxu0 %v380
        %1473 = vmatpush.msra.mxu0 %v374
        %1474 = vmatpush.msra.mxu0 %v368
        %1475 = vmatpush.msra.mxu0 %v362
        %1476 = vmatpush.msra.mxu0 %v356
        %1477 = vmatpush.msra.mxu0 %v350
        %1478 = vmatpush.msra.mxu0 %v344
        %1479 = vmatpush.msra.mxu0 %v338
        %1480 = vmatmul.f32.gmra.mxu0 %v833
        %v1481 = vpop.f32.mrf.mxu0
        %v1482 = vadd.f32 %v1462, %v1481
        %1483 = vdwg.mxu0
        %1484 = vmatpush.msra.mxu0 %v524
        %1485 = vmatpush.msra.mxu0 %v518
        %1486 = vmatpush.msra.mxu0 %v512
        %1487 = vmatpush.msra.mxu0 %v506
        %1488 = vmatpush.msra.mxu0 %v500
        %1489 = vmatpush.msra.mxu0 %v494
        %1490 = vmatpush.msra.mxu0 %v488
        %1491 = vmatpush.msra.mxu0 %v482
        %1492 = vmatpush.msra.mxu0 %v476
        %1493 = vmatpush.msra.mxu0 %v470
        %1494 = vmatpush.msra.mxu0 %v464
        %1495 = vmatpush.msra.mxu0 %v458
        %1496 = vmatpush.msra.mxu0 %v452
        %1497 = vmatpush.msra.mxu0 %v446
        %1498 = vmatpush.msra.mxu0 %v440
        %1499 = vmatpush.msra.mxu0 %v434
        %1500 = vmatmul.f32.gmra.mxu0 %v834
        %v1501 = vpop.f32.mrf.mxu0
        %v1502 = vadd.f32 %v1482, %v1501
        %1503 = vdwg.mxu0
        %1504 = vmatpush.msra.mxu0 %v620
        %1505 = vmatpush.msra.mxu0 %v614
        %1506 = vmatpush.msra.mxu0 %v608
        %1507 = vmatpush.msra.mxu0 %v602
        %1508 = vmatpush.msra.mxu0 %v596
        %1509 = vmatpush.msra.mxu0 %v590
        %1510 = vmatpush.msra.mxu0 %v584
        %1511 = vmatpush.msra.mxu0 %v578
        %1512 = vmatpush.msra.mxu0 %v572
        %1513 = vmatpush.msra.mxu0 %v566
        %1514 = vmatpush.msra.mxu0 %v560
        %1515 = vmatpush.msra.mxu0 %v554
        %1516 = vmatpush.msra.mxu0 %v548
        %1517 = vmatpush.msra.mxu0 %v542
        %1518 = vmatpush.msra.mxu0 %v536
        %1519 = vmatpush.msra.mxu0 %v530
        %1520 = vmatmul.f32.gmra.mxu0 %v835
        %v1521 = vpop.f32.mrf.mxu0
        %v1522 = vadd.f32 %v1502, %v1521
        %1523 = vdwg.mxu0
        %1524 = vmatpush.msra.mxu0 %v716
        %1525 = vmatpush.msra.mxu0 %v710
        %1526 = vmatpush.msra.mxu0 %v704
        %1527 = vmatpush.msra.mxu0 %v698
        %1528 = vmatpush.msra.mxu0 %v692
        %1529 = vmatpush.msra.mxu0 %v686
        %1530 = vmatpush.msra.mxu0 %v680
        %1531 = vmatpush.msra.mxu0 %v674
        %1532 = vmatpush.msra.mxu0 %v668
        %1533 = vmatpush.msra.mxu0 %v662
        %1534 = vmatpush.msra.mxu0 %v656
        %1535 = vmatpush.msra.mxu0 %v650
        %1536 = vmatpush.msra.mxu0 %v644
        %1537 = vmatpush.msra.mxu0 %v638
        %1538 = vmatpush.msra.mxu0 %v632
        %1539 = vmatpush.msra.mxu0 %v626
        %1540 = vmatmul.f32.gmra.mxu0 %v836
        %v1541 = vpop.f32.mrf.mxu0
        %v1542 = vadd.f32 %v1522, %v1541
        %1543 = vdwg.mxu0
        %1544 = vmatpush.msra.mxu0 %v812
        %1545 = vmatpush.msra.mxu0 %v806
        %1546 = vmatpush.msra.mxu0 %v800
        %1547 = vmatpush.msra.mxu0 %v794
        %1548 = vmatpush.msra.mxu0 %v788
        %1549 = vmatpush.msra.mxu0 %v782
        %1550 = vmatpush.msra.mxu0 %v776
        %1551 = vmatpush.msra.mxu0 %v770
        %1552 = vmatpush.msra.mxu0 %v764
        %1553 = vmatpush.msra.mxu0 %v758
        %1554 = vmatpush.msra.mxu0 %v752
        %1555 = vmatpush.msra.mxu0 %v746
        %1556 = vmatpush.msra.mxu0 %v740
        %1557 = vmatpush.msra.mxu0 %v734
        %1558 = vmatpush.msra.mxu0 %v728
        %1559 = vmatpush.msra.mxu0 %v722
        %1560 = vmatmul.f32.gmra.mxu0 %v837
        %v1561 = vpop.f32.mrf.mxu0
        %v1562 = vadd.f32 %v1542, %v1561
        %1563 = vdwg.mxu0
        %v1570 = vrot.slane %v1082, 6
        %v1571 = vrot.slane %v1202, 4
        %v1572 = vrot.slane %v1322, 2
        %v1573 = vrot.slane %v1562, 6
        %vm1574 = vcmask 1041408
        %v1575 = vsel %vm1574, %v962, %v1570
        %vm1576 = vcmask 1045508
        %v1577 = vsel %vm1576, %v1571, %v1572
        %vm1578 = vcmask 1043456
        %v1579 = vsel %vm1578, %v1575, %v1577
        %v1580 = vsel %vm1574, %v1442, %v1573
        %1583 = vst [vmem:[%s233] sm:$0xff] %v1579
        %1584 = vst [vmem:[%s233 + $0x8] sm:$0xf] %v1580
        %s1585 = smul.u32 6, %s20
        %p1586 = scmp.lt.s32.totalorder %s1585, 11
        %s1587 = scalar_select %p1586, %s1585, 11
        %s1588 = smul.addr %s1587, 2
        %s1589 = scalar_lea.vmem %s3, %s1588
        // Predicated region
        $region41: #{cls_mlp_head.1} parent=31 // pred_check
          %p1590 = pneg %p111
        $region42: #{cls_mlp_head.1} parent=31 // pred_check_branch
          %1592 = sbr.rel (%p1590) target = $region44
        $region43: #{cls_mlp_head.1} parent=31 // pred_region
          %s1593 = smul.u32 6, %s20
        $region44: #{cls_mlp_head.1} parent=31 // pred_fallthru
          _
      $region32: #{cls_mlp_head.1} parent=5 // pred_fallthru
        _
      %p1594 = scmp.le.s32.totalorder 2, %s15
      // Predicated region
      $region45: #{cls_mlp_head.1} parent=5 // pred_check
        %p1595 = pneg %p1594
      $region46: #{cls_mlp_head.1} parent=5 // pred_check_branch
        %1597 = sbr.rel (%p1595) target = $region48
      $region47: #{cls_mlp_head.1} parent=5 // pred_region
        %s1598 = ssub.s32 %s15, 2
        // Predicated region
        $region49: #{cls_mlp_head.1} parent=47 // pred_check
          %p1599 = pneg %p117
        $region50: #{cls_mlp_head.1} parent=47 // pred_check_branch
          %1601 = sbr.rel (%p1599) target = $region52
        $region51: #{cls_mlp_head.1} parent=47 // pred_region
          %s1602 = smul.u32 6, %s21
          %p1603 = scmp.lt.s32.totalorder %s1602, 11
          %s1604 = scalar_select %p1603, %s1602, 11
          %s1605 = smul.addr %s1604, 2
          %s1606 = scalar_lea.vmem %s3, %s1605
        $region52: #{cls_mlp_head.1} parent=47 // pred_fallthru
          _
      $region48: #{cls_mlp_head.1} parent=5 // pred_fallthru
        _
    $region6: #{cls_mlp_head.1} parent=1 // loop_footer
      %s19 = sadd.s32 1, %s15
    $region7: #{cls_mlp_head.1} parent=1 // loop_footer_branch
      %14 = sbr.rel target = $region3
    $region8: #{cls_mlp_head.1} parent=1 // loop_exit
      _
    %1607 = vsyncpa [#allocation3], 1
    %s1608 = scalar_lea.sflag [#allocation3], 1
    %1609 = vsyncpa %s1608, 1
    %1610 = vsyncpa [#allocation5], 1
    %s1611 = scalar_lea.sflag [#allocation5], 1
    %1612 = vsyncpa %s1611, 1

</llo_original>
